<compile_context>
chip_gen: v7x
topology: tpu7x:2x2x1
jax: 0.10.0
libtpu: 0.0.40
codegen_flags: <defaults>
</compile_context>

<pallas_src>
import jax
import jax.numpy as jnp
from jax import lax
from jax.experimental import pallas as pl
from jax.experimental.pallas import tpu as pltpu

_SQRT_HALF = 0.7071067811865476
_KSIZE, _STRIDE, _PAD = 4, 2, 1
_C1, _C2 = 64, 128                      # conv channel widths fixed by the module


# ----------------------- in-kernel math -----------------------

def _erf_approx(x):
    # Abramowitz & Stegun 7.1.26 rational approximation (|err| <= 1.5e-7 in f32);
    # lax.erf has no guaranteed Mosaic lowering.  The divide goes to the EUP via
    # pl.reciprocal(approx=True) + one Newton step (so accuracy ~ f32-exact while the
    # 4 VALU slots stay mostly free for the polynomial); exp also runs on the EUP.
    p = 0.3275911
    a1, a2, a3, a4, a5 = (0.254829592, -0.284496736, 1.421413741,
                          -1.453152027, 1.061405429)
    ax = jnp.abs(x)
    d = 1.0 + p * ax
    t = pl.reciprocal(d, approx=True)
    t = t * (2.0 - d * t)                       # Newton refinement of 1/d
    poly = ((((a5 * t + a4) * t + a3) * t + a2) * t + a1) * t
    y = 1.0 - poly * jnp.exp(-ax * ax)
    return jnp.where(x < 0, -y, y)


def _gelu(x):
    return 0.5 * x * (1.0 + _erf_approx(x * _SQRT_HALF))


def _conv_gelu(x, pcat_ref, w_ref, b_ref):
    """GELU(Conv1d(k=4,s=2,p=1)(x)) on a length-major (L_in, C_in) tile.

    One MXU pass gathers all four stride-2 taps at once (Pcat is the vertically
    stacked 0/1 selector; padding rows are all-zero), then one matmul per tap
    contracts C_in against that tap's weight slab.  The sublane slices of `g` are
    static and 8-aligned, so there are no relayouts.
    """
    g = jnp.dot(pcat_ref[...], x, preferred_element_type=jnp.float32)  # (4*L_out, C_in)
    l_out = pcat_ref.shape[0] // _KSIZE
    acc = None
    for k in range(_KSIZE):                                            # static unroll
        term = jnp.dot(g[k * l_out:(k + 1) * l_out, :], w_ref[k],
                       preferred_element_type=jnp.float32)
        acc = term if acc is None else acc + term
    return _gelu(acc + b_ref[...])


def _fused_kernel(x_ref, p1_ref, w1_ref, b1_ref, p2_ref, w2_ref, b2_ref,
                  wcd_ref, msk_ref, gsum_ref, bc_ref, out_ref):
    # One batch element per grid step; everything below stays in VMEM / vregs.
    x = x_ref[...]                                                     # (D, M) length-major

    # embedder[0:2]: Conv1d(M, 64, 4, 2, 1) + GELU              -> (D/2, 64)
    h1 = _conv_gelu(x, p1_ref, w1_ref, b1_ref)
    # embedder[2:5]: Conv1d(64, 128, 4, 2, 1) + GELU + Dropout  -> (D/4, 128)
    # TODO(synk): nn.Dropout() is stochastic in train mode; modeled as identity (eval mode).
    h2 = _conv_gelu(h1, p2_ref, w2_ref, b2_ref)

    # clf_fc on torch's channel-major flatten h.view(B,-1) of NCL (128, D/4), computed
    # without reshaping h2:  wcd[c, l'*n_out + o] = Wc[o, c*(D/4) + l'], hence
    #     t[l, l'*n_out + o] = sum_c h2[l, c] * Wc[o, c*(D/4) + l'] ;
    # masking the l == l' "diagonal" and summing each n_out-wide lane group gives exactly
    #     logits[o] = sum_{c,l} Wc[o, c*(D/4)+l] * h2[l, c].
    t = jnp.dot(h2, wcd_ref[...], preferred_element_type=jnp.float32)   # (D/4, D/4*n_out)
    v = jnp.sum(t * msk_ref[...], axis=0, keepdims=True)                # (1, D/4*n_out)
    logits = jnp.dot(v, gsum_ref[...],
                     preferred_element_type=jnp.float32) + bc_ref[...]  # (1, n_out)

    # Softmax(dim=-1).  Exact reciprocal on the (1,1)-sized denominator: free at this
    # size and keeps row sums == 1 to fp32 accuracy; exp runs on the EUP regardless.
    mx = jnp.max(logits, axis=-1, keepdims=True)
    e = jnp.exp(logits - mx)
    s = jnp.sum(e, axis=-1, keepdims=True)
    out_ref[...] = e * pl.reciprocal(s, approx=False)


# ----------------------- host-side parameter prep -----------------------

def _conv_selector_stack(l_in):
    """Stacked 0/1 tap selector: (Pcat @ x)[k*l_out + l, :] = x_zero-padded[2l + k - 1, :]."""
    l_out = (l_in + 2 * _PAD - _KSIZE) // _STRIDE + 1
    l_idx = jnp.arange(l_out)[:, None]
    j_idx = jnp.arange(l_in)[None, :]
    taps = [(j_idx == (_STRIDE * l_idx + k - _PAD)).astype(jnp.float32)
            for k in range(_KSIZE)]                 # out-of-range rows are all-zero = padding
    return jnp.concatenate(taps, axis=0)            # (K*l_out, l_in)


def init_torch_params(key, latent_dim, num_modalities):
    """Deterministic synthetic params in native torch layouts (Conv1d (O,I,K), Linear (out,in))."""
    assert _C2 * (latent_dim // 4) == 2048, "clf_fc = Linear(2048, M+1) requires latent_dim == 64"
    m = num_modalities
    ks = jax.random.split(key, 6)
    return {
        "w1": 0.10 * jax.random.normal(ks[0], (_C1, m, _KSIZE), jnp.float32),
        "b1": 0.05 * jax.random.normal(ks[1], (_C1,), jnp.float32),
        "w2": 0.05 * jax.random.normal(ks[2], (_C2, _C1, _KSIZE), jnp.float32),
        "b2": 0.05 * jax.random.normal(ks[3], (_C2,), jnp.float32),
        "wc": 0.02 * jax.random.normal(ks[4], (m + 1, 2048), jnp.float32),
        "bc": 0.02 * jax.random.normal(ks[5], (m + 1,), jnp.float32),
    }


def prepare_params(tp, latent_dim, num_modalities):
    """One-off repack into the layouts the fused kernel consumes (folds all transposes)."""
    m, n_out = num_modalities, num_modalities + 1
    l2 = latent_dim // 4
    l1 = latent_dim // 2
    # Conv weights per tap for NLC matmuls: w_taps[k, c_in, c_out] = W[c_out, c_in, k].
    w1_taps = jnp.transpose(tp["w1"], (2, 1, 0))                       # (4, M, 64)
    w2_taps = jnp.transpose(tp["w2"], (2, 1, 0))                       # (4, 64, 128)
    # Classifier weight permuted so the kernel never reshapes h2 (see kernel comment).
    wcd = jnp.transpose(tp["wc"].reshape(n_out, _C2, l2),
                        (1, 2, 0)).reshape(_C2, l2 * n_out)            # (128, l2*n_out)
    jj = jnp.arange(l2 * n_out)
    msk = (jj[None, :] // n_out == jnp.arange(l2)[:, None]).astype(jnp.float32)     # (l2, l2*n_out)
    gsum = (jj[:, None] % n_out == jnp.arange(n_out)[None, :]).astype(jnp.float32)  # (l2*n_out, n_out)
    return {
        "p1": _conv_selector_stack(latent_dim), "w1": w1_taps, "b1": tp["b1"].reshape(1, _C1),
        "p2": _conv_selector_stack(l1),         "w2": w2_taps, "b2": tp["b2"].reshape(1, _C2),
        "wcd": wcd, "msk": msk, "gsum": gsum, "bc": tp["bc"].reshape(1, n_out),
    }


# ----------------------- forward -----------------------

def odd_one_out_forward(mod_representations, params, latent_dim, num_modalities):
    b = mod_representations[0].shape[0]
    m, n_out, d = num_modalities, num_modalities + 1, latent_dim
    l1, l2 = d // 2, d // 4

    # torch: successive cat of (B,1,D) views along dim=1 -> (B, M, D) NCL; the kernel
    # works length-major (NLC), so stack along the last axis instead (same data).
    reps = jnp.stack([r.reshape(b, d) for r in mod_representations], axis=-1)   # (B, D, M)

    flops = b * 2 * ((_KSIZE * l1) * d * m + _KSIZE * (l1 * m * _C1)
                     + (_KSIZE * l2) * l1 * _C1 + _KSIZE * (l2 * _C1 * _C2)
                     + l2 * _C2 * (l2 * n_out) + (l2 * n_out) * n_out)
    transcendentals = b * 2 * (l1 * _C1 + l2 * _C2)
    bytes_accessed = 4 * (b * d * m + b * n_out + sum(int(v.size) for v in params.values()))

    out = pl.pallas_call(
        _fused_kernel,
        out_shape=jax.ShapeDtypeStruct((b, 1, n_out), jnp.float32),
        grid=(b,),
        in_specs=[
            pl.BlockSpec((None, d, m), lambda i: (i, 0, 0)),             # per-sample reps
            pl.BlockSpec((_KSIZE * l1, d), lambda i: (0, 0)),            # stacked selector 1
            pl.BlockSpec((_KSIZE, m, _C1), lambda i: (0, 0, 0)),         # w1 taps
            pl.BlockSpec((1, _C1), lambda i: (0, 0)),                    # b1
            pl.BlockSpec((_KSIZE * l2, l1), lambda i: (0, 0)),           # stacked selector 2
            pl.BlockSpec((_KSIZE, _C1, _C2), lambda i: (0, 0, 0)),       # w2 taps
            pl.BlockSpec((1, _C2), lambda i: (0, 0)),                    # b2
            pl.BlockSpec((_C2, l2 * n_out), lambda i: (0, 0)),           # clf weight (permuted)
            pl.BlockSpec((l2, l2 * n_out), lambda i: (0, 0)),            # diagonal mask
            pl.BlockSpec((l2 * n_out, n_out), lambda i: (0, 0)),         # group-sum matrix
            pl.BlockSpec((1, n_out), lambda i: (0, 0)),                  # clf bias
        ],
        out_specs=pl.BlockSpec((None, 1, n_out), lambda i: (i, 0, 0)),
        compiler_params=pltpu.CompilerParams(
            dimension_semantics=("parallel",)),       # batch splits across v7x's two TCs
        cost_estimate=pl.CostEstimate(flops=int(flops),
                                      transcendentals=int(transcendentals),
                                      bytes_accessed=int(bytes_accessed)),
    )(reps, params["p1"], params["w1"], params["b1"],
      params["p2"], params["w2"], params["b2"],
      params["wcd"], params["msk"], params["gsum"], params["bc"])
    return out.reshape(b, n_out)


# ----------------------- pure-JAX reference (torch layouts) -----------------------

def reference_forward(mod_representations, tp, latent_dim):
    b = mod_representations[0].shape[0]
    x = jnp.stack([r.reshape(b, latent_dim) for r in mod_representations], axis=1)   # (B, M, D)
    h = lax.conv_general_dilated(x, tp["w1"], (_STRIDE,), [(_PAD, _PAD)],
                                 dimension_numbers=("NCH", "OIH", "NCH"))
    h = jax.nn.gelu(h + tp["b1"][None, :, None], approximate=False)
    h = lax.conv_general_dilated(h, tp["w2"], (_STRIDE,), [(_PAD, _PAD)],
                                 dimension_numbers=("NCH", "OIH", "NCH"))
    h = jax.nn.gelu(h + tp["b2"][None, :, None], approximate=False)
    logits = h.reshape(b, -1) @ tp["wc"].T + tp["bc"]
    return jax.nn.softmax(logits, axis=-1)


if __name__ == "__main__":
    key = jax.random.PRNGKey(0)
    B, M, D = 2, 3, 64          # latent_dim=64 so that 128*(D//4) == 2048 (clf_fc input)
    k_in, k_par = jax.random.split(key)
    in_keys = jax.random.split(k_in, M)
    mod_reps = [jax.random.normal(in_keys[i], (B, D), jnp.float32) for i in range(M)]

    torch_params = init_torch_params(k_par, D, M)
    params = prepare_params(torch_params, D, M)

    out = jax.block_until_ready(odd_one_out_forward(mod_reps, params, D, M))
    ref = jax.block_until_ready(reference_forward(mod_reps, torch_params, D))

    assert out.shape == (B, M + 1)
    assert bool(jnp.all(jnp.isfinite(out)))
    assert bool(jnp.allclose(jnp.sum(out, axis=-1), 1.0, atol=1e-5))     # softmax rows
    # Newton-refined EUP reciprocal inside the erf-GELU -> kernel matches the exact-erf
    # reference to well under 1e-4 in output probabilities.
    assert bool(jnp.allclose(out, ref, atol=1e-4)), float(jnp.max(jnp.abs(out - ref)))
    print("KERNEL_OK")
</pallas_src>

<mosaic_0001>
module attributes {stable_mosaic.version = 11 : i64} {
  func.func @_fused_kernel(%arg0: i32, %arg1: memref<1x64x3xf32, #tpu.memory_space<vmem>>, %arg2: memref<128x64xf32, #tpu.memory_space<vmem>>, %arg3: memref<4x3x64xf32, #tpu.memory_space<vmem>>, %arg4: memref<1x64xf32, #tpu.memory_space<vmem>>, %arg5: memref<64x32xf32, #tpu.memory_space<vmem>>, %arg6: memref<4x64x128xf32, #tpu.memory_space<vmem>>, %arg7: memref<1x128xf32, #tpu.memory_space<vmem>>, %arg8: memref<128x64xf32, #tpu.memory_space<vmem>>, %arg9: memref<16x64xf32, #tpu.memory_space<vmem>>, %arg10: memref<64x4xf32, #tpu.memory_space<vmem>>, %arg11: memref<1x4xf32, #tpu.memory_space<vmem>>, %arg12: memref<1x1x4xf32, #tpu.memory_space<vmem>>) attributes {dimension_semantics = [#tpu.dimension_semantics<parallel>], iteration_bounds = array<i64: 2>, scalar_prefetch = 0 : i64, scratch_operands = 0 : i64, tpu.core_type = #tpu.core_type<tc>, window_params = [{transform_indices = @transform_0, window_bounds = array<i64: 1, 64, 3>}, {pipeline_mode = #tpu.pipeline_mode<synchronous>, transform_indices = @transform_1, window_bounds = array<i64: 128, 64>}, {pipeline_mode = #tpu.pipeline_mode<synchronous>, transform_indices = @transform_2, window_bounds = array<i64: 4, 3, 64>}, {pipeline_mode = #tpu.pipeline_mode<synchronous>, transform_indices = @transform_3, window_bounds = array<i64: 1, 64>}, {pipeline_mode = #tpu.pipeline_mode<synchronous>, transform_indices = @transform_4, window_bounds = array<i64: 64, 32>}, {pipeline_mode = #tpu.pipeline_mode<synchronous>, transform_indices = @transform_5, window_bounds = array<i64: 4, 64, 128>}, {pipeline_mode = #tpu.pipeline_mode<synchronous>, transform_indices = @transform_6, window_bounds = array<i64: 1, 128>}, {pipeline_mode = #tpu.pipeline_mode<synchronous>, transform_indices = @transform_7, window_bounds = array<i64: 128, 64>}, {pipeline_mode = #tpu.pipeline_mode<synchronous>, transform_indices = @transform_8, window_bounds = array<i64: 16, 64>}, {pipeline_mode = #tpu.pipeline_mode<synchronous>, transform_indices = @transform_9, window_bounds = array<i64: 64, 4>}, {pipeline_mode = #tpu.pipeline_mode<synchronous>, transform_indices = @transform_10, window_bounds = array<i64: 1, 4>}, {transform_indices = @transform_11, window_bounds = array<i64: 1, 1, 4>}]} {
    %c0 = arith.constant 0 : index
    %c0_0 = arith.constant 0 : index
    %c0_1 = arith.constant 0 : index
    %0 = vector.load %arg1[%c0, %c0_0, %c0_1] : memref<1x64x3xf32, #tpu.memory_space<vmem>>, vector<1x64x3xf32>
    %1 = vector.shape_cast %0 : vector<1x64x3xf32> to vector<64x3xf32>
    %c0_2 = arith.constant 0 : index
    %c0_3 = arith.constant 0 : index
    %2 = vector.load %arg2[%c0_2, %c0_3] : memref<128x64xf32, #tpu.memory_space<vmem>>, vector<128x64xf32>
    %cst = arith.constant dense<0.000000e+00> : vector<128x3xf32>
    %3 = tpu.matmul %2, %1, %cst {dimension_numbers = #tpu.dot_dimension_numbers<[1], [0], [0], [1], [0, 0, 1, 1], [], []>} : vector<128x64xf32>, vector<64x3xf32>, vector<128x3xf32> -> vector<128x3xf32>
    %4 = vector.extract_strided_slice %3 {offsets = [0, 0], sizes = [32, 3], strides = [1, 1]} : vector<128x3xf32> to vector<32x3xf32>
    %c0_4 = arith.constant 0 : index
    %c0_5 = arith.constant 0 : index
    %c0_6 = arith.constant 0 : index
    %5 = vector.load %arg3[%c0_4, %c0_5, %c0_6] : memref<4x3x64xf32, #tpu.memory_space<vmem>>, vector<1x3x64xf32>
    %6 = vector.shape_cast %5 : vector<1x3x64xf32> to vector<3x64xf32>
    %cst_7 = arith.constant dense<0.000000e+00> : vector<32x64xf32>
    %7 = tpu.matmul %4, %6, %cst_7 {dimension_numbers = #tpu.dot_dimension_numbers<[1], [0], [0], [1], [0, 0, 1, 1], [], []>} : vector<32x3xf32>, vector<3x64xf32>, vector<32x64xf32> -> vector<32x64xf32>
    %8 = vector.extract_strided_slice %3 {offsets = [32, 0], sizes = [32, 3], strides = [1, 1]} : vector<128x3xf32> to vector<32x3xf32>
    %c1 = arith.constant 1 : index
    %c0_8 = arith.constant 0 : index
    %c0_9 = arith.constant 0 : index
    %9 = vector.load %arg3[%c1, %c0_8, %c0_9] : memref<4x3x64xf32, #tpu.memory_space<vmem>>, vector<1x3x64xf32>
    %10 = vector.shape_cast %9 : vector<1x3x64xf32> to vector<3x64xf32>
    %cst_10 = arith.constant dense<0.000000e+00> : vector<32x64xf32>
    %11 = tpu.matmul %8, %10, %cst_10 {dimension_numbers = #tpu.dot_dimension_numbers<[1], [0], [0], [1], [0, 0, 1, 1], [], []>} : vector<32x3xf32>, vector<3x64xf32>, vector<32x64xf32> -> vector<32x64xf32>
    %12 = arith.addf %7, %11 : vector<32x64xf32>
    %13 = vector.extract_strided_slice %3 {offsets = [64, 0], sizes = [32, 3], strides = [1, 1]} : vector<128x3xf32> to vector<32x3xf32>
    %c2 = arith.constant 2 : index
    %c0_11 = arith.constant 0 : index
    %c0_12 = arith.constant 0 : index
    %14 = vector.load %arg3[%c2, %c0_11, %c0_12] : memref<4x3x64xf32, #tpu.memory_space<vmem>>, vector<1x3x64xf32>
    %15 = vector.shape_cast %14 : vector<1x3x64xf32> to vector<3x64xf32>
    %cst_13 = arith.constant dense<0.000000e+00> : vector<32x64xf32>
    %16 = tpu.matmul %13, %15, %cst_13 {dimension_numbers = #tpu.dot_dimension_numbers<[1], [0], [0], [1], [0, 0, 1, 1], [], []>} : vector<32x3xf32>, vector<3x64xf32>, vector<32x64xf32> -> vector<32x64xf32>
    %17 = arith.addf %12, %16 : vector<32x64xf32>
    %18 = vector.extract_strided_slice %3 {offsets = [96, 0], sizes = [32, 3], strides = [1, 1]} : vector<128x3xf32> to vector<32x3xf32>
    %c3 = arith.constant 3 : index
    %c0_14 = arith.constant 0 : index
    %c0_15 = arith.constant 0 : index
    %19 = vector.load %arg3[%c3, %c0_14, %c0_15] : memref<4x3x64xf32, #tpu.memory_space<vmem>>, vector<1x3x64xf32>
    %20 = vector.shape_cast %19 : vector<1x3x64xf32> to vector<3x64xf32>
    %cst_16 = arith.constant dense<0.000000e+00> : vector<32x64xf32>
    %21 = tpu.matmul %18, %20, %cst_16 {dimension_numbers = #tpu.dot_dimension_numbers<[1], [0], [0], [1], [0, 0, 1, 1], [], []>} : vector<32x3xf32>, vector<3x64xf32>, vector<32x64xf32> -> vector<32x64xf32>
    %22 = arith.addf %17, %21 : vector<32x64xf32>
    %c0_17 = arith.constant 0 : index
    %c0_18 = arith.constant 0 : index
    %23 = vector.load %arg4[%c0_17, %c0_18] : memref<1x64xf32, #tpu.memory_space<vmem>>, vector<1x64xf32>
    %24 = vector.broadcast %23 : vector<1x64xf32> to vector<32x64xf32>
    %25 = arith.addf %22, %24 : vector<32x64xf32>
    %cst_19 = arith.constant 5.000000e-01 : f32
    %26 = vector.broadcast %cst_19 : f32 to vector<32x64xf32>
    %27 = arith.mulf %26, %25 : vector<32x64xf32>
    %cst_20 = arith.constant 0.707106769 : f32
    %28 = vector.broadcast %cst_20 : f32 to vector<32x64xf32>
    %29 = arith.mulf %25, %28 : vector<32x64xf32>
    %30 = math.absf %29 : vector<32x64xf32>
    %cst_21 = arith.constant 0.327591091 : f32
    %31 = vector.broadcast %cst_21 : f32 to vector<32x64xf32>
    %32 = arith.mulf %31, %30 : vector<32x64xf32>
    %cst_22 = arith.constant 1.000000e+00 : f32
    %33 = vector.broadcast %cst_22 : f32 to vector<32x64xf32>
    %34 = arith.addf %33, %32 : vector<32x64xf32>
    %35 = tpu.reciprocal %34 {approx = true} : vector<32x64xf32> -> vector<32x64xf32>
    %36 = arith.mulf %34, %35 : vector<32x64xf32>
    %cst_23 = arith.constant 2.000000e+00 : f32
    %37 = vector.broadcast %cst_23 : f32 to vector<32x64xf32>
    %38 = arith.subf %37, %36 : vector<32x64xf32>
    %39 = arith.mulf %35, %38 : vector<32x64xf32>
    %cst_24 = arith.constant 1.06140542 : f32
    %40 = vector.broadcast %cst_24 : f32 to vector<32x64xf32>
    %41 = arith.mulf %40, %39 : vector<32x64xf32>
    %cst_25 = arith.constant -1.45315206 : f32
    %42 = vector.broadcast %cst_25 : f32 to vector<32x64xf32>
    %43 = arith.addf %41, %42 : vector<32x64xf32>
    %44 = arith.mulf %43, %39 : vector<32x64xf32>
    %cst_26 = arith.constant 1.42141378 : f32
    %45 = vector.broadcast %cst_26 : f32 to vector<32x64xf32>
    %46 = arith.addf %44, %45 : vector<32x64xf32>
    %47 = arith.mulf %46, %39 : vector<32x64xf32>
    %cst_27 = arith.constant -0.284496725 : f32
    %48 = vector.broadcast %cst_27 : f32 to vector<32x64xf32>
    %49 = arith.addf %47, %48 : vector<32x64xf32>
    %50 = arith.mulf %49, %39 : vector<32x64xf32>
    %cst_28 = arith.constant 0.254829586 : f32
    %51 = vector.broadcast %cst_28 : f32 to vector<32x64xf32>
    %52 = arith.addf %50, %51 : vector<32x64xf32>
    %53 = arith.mulf %52, %39 : vector<32x64xf32>
    %cst_29 = arith.constant 0.000000e+00 : f32
    %54 = vector.broadcast %cst_29 : f32 to vector<32x64xf32>
    %55 = arith.subf %54, %30 : vector<32x64xf32>
    %56 = arith.mulf %55, %30 : vector<32x64xf32>
    %57 = math.exp %56 : vector<32x64xf32>
    %58 = arith.mulf %53, %57 : vector<32x64xf32>
    %cst_30 = arith.constant 1.000000e+00 : f32
    %59 = vector.broadcast %cst_30 : f32 to vector<32x64xf32>
    %60 = arith.subf %59, %58 : vector<32x64xf32>
    %cst_31 = arith.constant 0.000000e+00 : f32
    %61 = vector.broadcast %cst_31 : f32 to vector<32x64xf32>
    %62 = arith.cmpf olt, %29, %61 : vector<32x64xf32>
    %cst_32 = arith.constant 0.000000e+00 : f32
    %63 = vector.broadcast %cst_32 : f32 to vector<32x64xf32>
    %64 = arith.subf %63, %60 : vector<32x64xf32>
    %65 = arith.select %62, %64, %60 : vector<32x64xi1>, vector<32x64xf32>
    %cst_33 = arith.constant 1.000000e+00 : f32
    %66 = vector.broadcast %cst_33 : f32 to vector<32x64xf32>
    %67 = arith.addf %66, %65 : vector<32x64xf32>
    %68 = arith.mulf %27, %67 : vector<32x64xf32>
    %c0_34 = arith.constant 0 : index
    %c0_35 = arith.constant 0 : index
    %69 = vector.load %arg5[%c0_34, %c0_35] : memref<64x32xf32, #tpu.memory_space<vmem>>, vector<64x32xf32>
    %cst_36 = arith.constant dense<0.000000e+00> : vector<64x64xf32>
    %70 = tpu.matmul %69, %68, %cst_36 {dimension_numbers = #tpu.dot_dimension_numbers<[1], [0], [0], [1], [0, 0, 1, 1], [], []>} : vector<64x32xf32>, vector<32x64xf32>, vector<64x64xf32> -> vector<64x64xf32>
    %71 = vector.extract_strided_slice %70 {offsets = [0, 0], sizes = [16, 64], strides = [1, 1]} : vector<64x64xf32> to vector<16x64xf32>
    %c0_37 = arith.constant 0 : index
    %c0_38 = arith.constant 0 : index
    %c0_39 = arith.constant 0 : index
    %72 = vector.load %arg6[%c0_37, %c0_38, %c0_39] : memref<4x64x128xf32, #tpu.memory_space<vmem>>, vector<1x64x128xf32>
    %73 = vector.shape_cast %72 : vector<1x64x128xf32> to vector<64x128xf32>
    %cst_40 = arith.constant dense<0.000000e+00> : vector<16x128xf32>
    %74 = tpu.matmul %71, %73, %cst_40 {dimension_numbers = #tpu.dot_dimension_numbers<[1], [0], [0], [1], [0, 0, 1, 1], [], []>} : vector<16x64xf32>, vector<64x128xf32>, vector<16x128xf32> -> vector<16x128xf32>
    %75 = vector.extract_strided_slice %70 {offsets = [16, 0], sizes = [16, 64], strides = [1, 1]} : vector<64x64xf32> to vector<16x64xf32>
    %c1_41 = arith.constant 1 : index
    %c0_42 = arith.constant 0 : index
    %c0_43 = arith.constant 0 : index
    %76 = vector.load %arg6[%c1_41, %c0_42, %c0_43] : memref<4x64x128xf32, #tpu.memory_space<vmem>>, vector<1x64x128xf32>
    %77 = vector.shape_cast %76 : vector<1x64x128xf32> to vector<64x128xf32>
    %cst_44 = arith.constant dense<0.000000e+00> : vector<16x128xf32>
    %78 = tpu.matmul %75, %77, %cst_44 {dimension_numbers = #tpu.dot_dimension_numbers<[1], [0], [0], [1], [0, 0, 1, 1], [], []>} : vector<16x64xf32>, vector<64x128xf32>, vector<16x128xf32> -> vector<16x128xf32>
    %79 = arith.addf %74, %78 : vector<16x128xf32>
    %80 = vector.extract_strided_slice %70 {offsets = [32, 0], sizes = [16, 64], strides = [1, 1]} : vector<64x64xf32> to vector<16x64xf32>
    %c2_45 = arith.constant 2 : index
    %c0_46 = arith.constant 0 : index
    %c0_47 = arith.constant 0 : index
    %81 = vector.load %arg6[%c2_45, %c0_46, %c0_47] : memref<4x64x128xf32, #tpu.memory_space<vmem>>, vector<1x64x128xf32>
    %82 = vector.shape_cast %81 : vector<1x64x128xf32> to vector<64x128xf32>
    %cst_48 = arith.constant dense<0.000000e+00> : vector<16x128xf32>
    %83 = tpu.matmul %80, %82, %cst_48 {dimension_numbers = #tpu.dot_dimension_numbers<[1], [0], [0], [1], [0, 0, 1, 1], [], []>} : vector<16x64xf32>, vector<64x128xf32>, vector<16x128xf32> -> vector<16x128xf32>
    %84 = arith.addf %79, %83 : vector<16x128xf32>
    %85 = vector.extract_strided_slice %70 {offsets = [48, 0], sizes = [16, 64], strides = [1, 1]} : vector<64x64xf32> to vector<16x64xf32>
    %c3_49 = arith.constant 3 : index
    %c0_50 = arith.constant 0 : index
    %c0_51 = arith.constant 0 : index
    %86 = vector.load %arg6[%c3_49, %c0_50, %c0_51] : memref<4x64x128xf32, #tpu.memory_space<vmem>>, vector<1x64x128xf32>
    %87 = vector.shape_cast %86 : vector<1x64x128xf32> to vector<64x128xf32>
    %cst_52 = arith.constant dense<0.000000e+00> : vector<16x128xf32>
    %88 = tpu.matmul %85, %87, %cst_52 {dimension_numbers = #tpu.dot_dimension_numbers<[1], [0], [0], [1], [0, 0, 1, 1], [], []>} : vector<16x64xf32>, vector<64x128xf32>, vector<16x128xf32> -> vector<16x128xf32>
    %89 = arith.addf %84, %88 : vector<16x128xf32>
    %c0_53 = arith.constant 0 : index
    %c0_54 = arith.constant 0 : index
    %90 = vector.load %arg7[%c0_53, %c0_54] : memref<1x128xf32, #tpu.memory_space<vmem>>, vector<1x128xf32>
    %91 = vector.broadcast %90 : vector<1x128xf32> to vector<16x128xf32>
    %92 = arith.addf %89, %91 : vector<16x128xf32>
    %cst_55 = arith.constant 5.000000e-01 : f32
    %93 = vector.broadcast %cst_55 : f32 to vector<16x128xf32>
    %94 = arith.mulf %93, %92 : vector<16x128xf32>
    %cst_56 = arith.constant 0.707106769 : f32
    %95 = vector.broadcast %cst_56 : f32 to vector<16x128xf32>
    %96 = arith.mulf %92, %95 : vector<16x128xf32>
    %97 = math.absf %96 : vector<16x128xf32>
    %cst_57 = arith.constant 0.327591091 : f32
    %98 = vector.broadcast %cst_57 : f32 to vector<16x128xf32>
    %99 = arith.mulf %98, %97 : vector<16x128xf32>
    %cst_58 = arith.constant 1.000000e+00 : f32
    %100 = vector.broadcast %cst_58 : f32 to vector<16x128xf32>
    %101 = arith.addf %100, %99 : vector<16x128xf32>
    %102 = tpu.reciprocal %101 {approx = true} : vector<16x128xf32> -> vector<16x128xf32>
    %103 = arith.mulf %101, %102 : vector<16x128xf32>
    %cst_59 = arith.constant 2.000000e+00 : f32
    %104 = vector.broadcast %cst_59 : f32 to vector<16x128xf32>
    %105 = arith.subf %104, %103 : vector<16x128xf32>
    %106 = arith.mulf %102, %105 : vector<16x128xf32>
    %cst_60 = arith.constant 1.06140542 : f32
    %107 = vector.broadcast %cst_60 : f32 to vector<16x128xf32>
    %108 = arith.mulf %107, %106 : vector<16x128xf32>
    %cst_61 = arith.constant -1.45315206 : f32
    %109 = vector.broadcast %cst_61 : f32 to vector<16x128xf32>
    %110 = arith.addf %108, %109 : vector<16x128xf32>
    %111 = arith.mulf %110, %106 : vector<16x128xf32>
    %cst_62 = arith.constant 1.42141378 : f32
    %112 = vector.broadcast %cst_62 : f32 to vector<16x128xf32>
    %113 = arith.addf %111, %112 : vector<16x128xf32>
    %114 = arith.mulf %113, %106 : vector<16x128xf32>
    %cst_63 = arith.constant -0.284496725 : f32
    %115 = vector.broadcast %cst_63 : f32 to vector<16x128xf32>
    %116 = arith.addf %114, %115 : vector<16x128xf32>
    %117 = arith.mulf %116, %106 : vector<16x128xf32>
    %cst_64 = arith.constant 0.254829586 : f32
    %118 = vector.broadcast %cst_64 : f32 to vector<16x128xf32>
    %119 = arith.addf %117, %118 : vector<16x128xf32>
    %120 = arith.mulf %119, %106 : vector<16x128xf32>
    %cst_65 = arith.constant 0.000000e+00 : f32
    %121 = vector.broadcast %cst_65 : f32 to vector<16x128xf32>
    %122 = arith.subf %121, %97 : vector<16x128xf32>
    %123 = arith.mulf %122, %97 : vector<16x128xf32>
    %124 = math.exp %123 : vector<16x128xf32>
    %125 = arith.mulf %120, %124 : vector<16x128xf32>
    %cst_66 = arith.constant 1.000000e+00 : f32
    %126 = vector.broadcast %cst_66 : f32 to vector<16x128xf32>
    %127 = arith.subf %126, %125 : vector<16x128xf32>
    %cst_67 = arith.constant 0.000000e+00 : f32
    %128 = vector.broadcast %cst_67 : f32 to vector<16x128xf32>
    %129 = arith.cmpf olt, %96, %128 : vector<16x128xf32>
    %cst_68 = arith.constant 0.000000e+00 : f32
    %130 = vector.broadcast %cst_68 : f32 to vector<16x128xf32>
    %131 = arith.subf %130, %127 : vector<16x128xf32>
    %132 = arith.select %129, %131, %127 : vector<16x128xi1>, vector<16x128xf32>
    %cst_69 = arith.constant 1.000000e+00 : f32
    %133 = vector.broadcast %cst_69 : f32 to vector<16x128xf32>
    %134 = arith.addf %133, %132 : vector<16x128xf32>
    %135 = arith.mulf %94, %134 : vector<16x128xf32>
    %c0_70 = arith.constant 0 : index
    %c0_71 = arith.constant 0 : index
    %136 = vector.load %arg8[%c0_70, %c0_71] : memref<128x64xf32, #tpu.memory_space<vmem>>, vector<128x64xf32>
    %cst_72 = arith.constant dense<0.000000e+00> : vector<16x64xf32>
    %137 = tpu.matmul %135, %136, %cst_72 {dimension_numbers = #tpu.dot_dimension_numbers<[1], [0], [0], [1], [0, 0, 1, 1], [], []>} : vector<16x128xf32>, vector<128x64xf32>, vector<16x64xf32> -> vector<16x64xf32>
    %c0_73 = arith.constant 0 : index
    %c0_74 = arith.constant 0 : index
    %138 = vector.load %arg9[%c0_73, %c0_74] : memref<16x64xf32, #tpu.memory_space<vmem>>, vector<16x64xf32>
    %139 = arith.mulf %137, %138 : vector<16x64xf32>
    %cst_75 = arith.constant dense<0.000000e+00> : vector<64xf32>
    %140 = vector.multi_reduction <add>, %139, %cst_75 [0] : vector<16x64xf32> to vector<64xf32>
    %141 = vector.shape_cast %140 : vector<64xf32> to vector<1x64xf32>
    %c0_76 = arith.constant 0 : index
    %c0_77 = arith.constant 0 : index
    %142 = vector.load %arg10[%c0_76, %c0_77] : memref<64x4xf32, #tpu.memory_space<vmem>>, vector<64x4xf32>
    %cst_78 = arith.constant dense<0.000000e+00> : vector<1x4xf32>
    %143 = tpu.matmul %141, %142, %cst_78 {dimension_numbers = #tpu.dot_dimension_numbers<[1], [0], [0], [1], [0, 0, 1, 1], [], []>} : vector<1x64xf32>, vector<64x4xf32>, vector<1x4xf32> -> vector<1x4xf32>
    %c0_79 = arith.constant 0 : index
    %c0_80 = arith.constant 0 : index
    %144 = vector.load %arg11[%c0_79, %c0_80] : memref<1x4xf32, #tpu.memory_space<vmem>>, vector<1x4xf32>
    %145 = arith.addf %143, %144 : vector<1x4xf32>
    %cst_81 = arith.constant dense<0xFF800000> : vector<1xf32>
    %146 = vector.multi_reduction <maximumf>, %145, %cst_81 [1] : vector<1x4xf32> to vector<1xf32>
    %147 = vector.shape_cast %146 : vector<1xf32> to vector<1x1xf32>
    %148 = vector.broadcast %147 : vector<1x1xf32> to vector<1x4xf32>
    %149 = arith.subf %145, %148 : vector<1x4xf32>
    %150 = math.exp %149 : vector<1x4xf32>
    %cst_82 = arith.constant dense<0.000000e+00> : vector<1xf32>
    %151 = vector.multi_reduction <add>, %150, %cst_82 [1] : vector<1x4xf32> to vector<1xf32>
    %152 = vector.shape_cast %151 : vector<1xf32> to vector<1x1xf32>
    %153 = tpu.reciprocal %152 : vector<1x1xf32> -> vector<1x1xf32>
    %154 = vector.broadcast %153 : vector<1x1xf32> to vector<1x4xf32>
    %155 = arith.mulf %150, %154 : vector<1x4xf32>
    %c0_83 = arith.constant 0 : index
    %c0_84 = arith.constant 0 : index
    %c0_85 = arith.constant 0 : index
    %156 = vector.load %arg12[%c0_83, %c0_84, %c0_85] : memref<1x1x4xf32, #tpu.memory_space<vmem>>, vector<1x1x4xf32>
    %157 = vector.shape_cast %156 : vector<1x1x4xf32> to vector<1x4xf32>
    %158 = vector.shape_cast %155 : vector<1x4xf32> to vector<1x1x4xf32>
    tpu.vector_store %arg12[%c0_83, %c0_84, %c0_85], %158 {strides = array<i32>} : memref<1x1x4xf32, #tpu.memory_space<vmem>>, vector<1x1x4xf32>,
    return
  }
  func.func @transform_0(%arg0: i32) -> (i32, i32, i32) {
    %c0_i32 = arith.constant 0 : i32
    %c0_i32_0 = arith.constant 0 : i32
    %c0_i32_1 = arith.constant 0 : i32
    return %arg0, %c0_i32, %c0_i32_0 : i32, i32, i32
  }
  func.func @transform_1(%arg0: i32) -> (i32, i32) {
    %c0_i32 = arith.constant 0 : i32
    %c0_i32_0 = arith.constant 0 : i32
    %c0_i32_1 = arith.constant 0 : i32
    return %c0_i32, %c0_i32_0 : i32, i32
  }
  func.func @transform_2(%arg0: i32) -> (i32, i32, i32) {
    %c0_i32 = arith.constant 0 : i32
    %c0_i32_0 = arith.constant 0 : i32
    %c0_i32_1 = arith.constant 0 : i32
    %c0_i32_2 = arith.constant 0 : i32
    return %c0_i32, %c0_i32_0, %c0_i32_1 : i32, i32, i32
  }
  func.func @transform_3(%arg0: i32) -> (i32, i32) {
    %c0_i32 = arith.constant 0 : i32
    %c0_i32_0 = arith.constant 0 : i32
    %c0_i32_1 = arith.constant 0 : i32
    return %c0_i32, %c0_i32_0 : i32, i32
  }
  func.func @transform_4(%arg0: i32) -> (i32, i32) {
    %c0_i32 = arith.constant 0 : i32
    %c0_i32_0 = arith.constant 0 : i32
    %c0_i32_1 = arith.constant 0 : i32
    return %c0_i32, %c0_i32_0 : i32, i32
  }
  func.func @transform_5(%arg0: i32) -> (i32, i32, i32) {
    %c0_i32 = arith.constant 0 : i32
    %c0_i32_0 = arith.constant 0 : i32
    %c0_i32_1 = arith.constant 0 : i32
    %c0_i32_2 = arith.constant 0 : i32
    return %c0_i32, %c0_i32_0, %c0_i32_1 : i32, i32, i32
  }
  func.func @transform_6(%arg0: i32) -> (i32, i32) {
    %c0_i32 = arith.constant 0 : i32
    %c0_i32_0 = arith.constant 0 : i32
    %c0_i32_1 = arith.constant 0 : i32
    return %c0_i32, %c0_i32_0 : i32, i32
  }
  func.func @transform_7(%arg0: i32) -> (i32, i32) {
    %c0_i32 = arith.constant 0 : i32
    %c0_i32_0 = arith.constant 0 : i32
    %c0_i32_1 = arith.constant 0 : i32
    return %c0_i32, %c0_i32_0 : i32, i32
  }
  func.func @transform_8(%arg0: i32) -> (i32, i32) {
    %c0_i32 = arith.constant 0 : i32
    %c0_i32_0 = arith.constant 0 : i32
    %c0_i32_1 = arith.constant 0 : i32
    return %c0_i32, %c0_i32_0 : i32, i32
  }
  func.func @transform_9(%arg0: i32) -> (i32, i32) {
    %c0_i32 = arith.constant 0 : i32
    %c0_i32_0 = arith.constant 0 : i32
    %c0_i32_1 = arith.constant 0 : i32
    return %c0_i32, %c0_i32_0 : i32, i32
  }
  func.func @transform_10(%arg0: i32) -> (i32, i32) {
    %c0_i32 = arith.constant 0 : i32
    %c0_i32_0 = arith.constant 0 : i32
    %c0_i32_1 = arith.constant 0 : i32
    return %c0_i32, %c0_i32_0 : i32, i32
  }
  func.func @transform_11(%arg0: i32) -> (i32, i32, i32) {
    %c0_i32 = arith.constant 0 : i32
    %c0_i32_0 = arith.constant 0 : i32
    %c0_i32_1 = arith.constant 0 : i32
    return %arg0, %c0_i32, %c0_i32_0 : i32, i32, i32
  }
}

</mosaic_0001>

<llo_original>
// kernel: tpu_custom_call.1
$region0: #{tpu_custom_call.1}
  #allocation0 [shape = 'u32[]', space=smem, size = 0x4, offset = 0x4, fixed_abs, tag = 'smem constant byte address 0x4 - core index']
  #allocation1 [shape = 'u32[144,128]{1,0:T(1,128)}', space=vmem, size = 0x12000, scoped, tag = 'internal scratch']
  %s0 = inlined_call_operand.vmem [shape: f32[2,64,3], index: 0, kind: input, shape index: {}]
  %s1 = inlined_call_operand.vmem [shape: f32[128,64], index: 1, kind: input, shape index: {}]
  %s2 = inlined_call_operand.vmem [shape: f32[4,3,64], index: 2, kind: input, shape index: {}]
  %s3 = inlined_call_operand.vmem [shape: f32[1,64], index: 3, kind: input, shape index: {}]
  %s4 = inlined_call_operand.vmem [shape: f32[64,32], index: 4, kind: input, shape index: {}]
  %s5 = inlined_call_operand.vmem [shape: f32[4,64,128], index: 5, kind: input, shape index: {}]
  %s6 = inlined_call_operand.vmem [shape: f32[1,128], index: 6, kind: input, shape index: {}]
  %s7 = inlined_call_operand.vmem [shape: f32[128,64], index: 7, kind: input, shape index: {}]
  %s8 = inlined_call_operand.vmem [shape: f32[16,64], index: 8, kind: input, shape index: {}]
  %s9 = inlined_call_operand.vmem [shape: f32[64,4], index: 9, kind: input, shape index: {}]
  %s10 = inlined_call_operand.vmem [shape: f32[1,4], index: 10, kind: input, shape index: {}]
  %s11 = inlined_call_operand.hbm [shape: f32[2,1,4], index: 11, kind: output, shape index: {}]
  %s12 = sld [smem:[#allocation0]]
  $region77: #{tpu_custom_call.1} parent=0
    _
  %s14 = ssub.s32 1, %s12
  %s15 = scalar_select 0, %s14, %s12
  $region1: #{tpu_custom_call.1} parent=0
    #allocation2 [shape = 'u8[1024]{0}', space=vmem, size = 0x400, scoped, tag = 'output window, operand 0']
    #allocation3 [shape = 's32[2]{0}', space=sflag, size = 0x8, scoped, tag = 'scoped memory for tpu_custom_call.1']
    %16 = vsyncpa [#allocation3], 0
    %s17 = scalar_lea.sflag [#allocation3], 1
    %18 = vsyncpa %s17, 0
    loop: start=0, step=1, limit=4
    $region2: #{tpu_custom_call.1} parent=1 // loop_pre_header
      _
    $region3: #{tpu_custom_call.1} parent=1 // loop_header
      %s20 = sphi 0, %s24
      %p21 = scmp.ge.s32.totalorder %s20, 4
      %s30 = sphi 0, %s32
      %s33 = sphi 0, %s30
      %s34 = sphi 0, %s33
      %s50 = sphi 0, %s34
      %s54 = sphi 0, %s54
      %s56 = sphi 0, %s54
      %s57 = sphi 0, %s56
      %s71 = sphi 0, %s57
      %s75 = sphi 0, %s75
      %s77 = sphi 0, %s75
      %s78 = sphi 0, %s77
      %s92 = sphi 0, %s78
      %s96 = sphi 0, %s96
      %s98 = sphi 0, %s96
      %s99 = sphi 0, %s98
      %s113 = sphi 0, %s99
      %s117 = sphi 0, %s117
      %s119 = sphi 0, %s117
      %s120 = sphi 0, %s119
      %s134 = sphi 0, %s120
      %s138 = sphi 0, %s138
      %s140 = sphi 0, %s138
      %s141 = sphi 0, %s140
      %s155 = sphi 0, %s141
      %s159 = sphi 0, %s159
      %s161 = sphi 0, %s159
      %s162 = sphi 0, %s161
      %s176 = sphi 0, %s162
      %s180 = sphi 0, %s180
      %s182 = sphi 0, %s180
      %s183 = sphi 0, %s182
      %s197 = sphi 0, %s183
      %s201 = sphi 0, %s201
      %s203 = sphi 0, %s201
      %s204 = sphi 0, %s203
      %s218 = sphi 0, %s204
      %s222 = sphi 0, %s222
      %s224 = sphi 0, %s222
      %s225 = sphi 0, %s224
      %s239 = sphi 0, %s225
      %s243 = sphi 0, %s243
      %s245 = sphi 0, %s243
      %s246 = sphi 0, %s245
      %s260 = sphi 0, %s246
      %s266 = sphi 0, %s268
      %s269 = sphi 0, %s266
      %s270 = sphi 0, %s269
      %s286 = sphi 0, %s270
    $region4: #{tpu_custom_call.1} parent=1 // loop_header_branch
      %23 = sbr.rel (%p21) target = $region8
    $region5: #{tpu_custom_call.1} parent=1 // loop_body
      %s25 = ssub.s32 %s20, 1
      %s26 = ssub.s32 %s20, 2
      %s27 = sadd.s32 %s20, 1
      %s28 = ssub.s32 %s20, %s27
      %p29 = scmp.eq.s32.totalorder %s28, 0
      %s31 = sadd.s32 %s30, 1
      %s32 = scalar_select %p29, %s30, %s31
      %p35 = pneg %p29
      %p36 = scmp.eq.s32.totalorder %s20, 1
      %p37 = por %p35, %p36
      %p38 = scmp.ne.s32.totalorder %s30, %s33
      %p39 = scmp.eq.s32.totalorder %s20, 0
      %p40 = por %p38, %p39
      %p41 = scmp.ne.s32.totalorder %s30, %s33
      %p42 = scmp.eq.s32.totalorder %s25, 1
      %p43 = por %p41, %p42
      %p44 = scmp.ne.s32.totalorder %s33, %s34
      %p45 = scmp.eq.s32.totalorder %s25, 0
      %p46 = por %p44, %p45
      %p47 = scmp.ne.s32.totalorder %s33, %s34
      %p48 = scmp.eq.s32.totalorder %s26, 1
      %p49 = por %p47, %p48
      %p51 = scmp.ne.s32.totalorder %s34, %s50
      %p52 = scmp.eq.s32.totalorder %s26, 0
      %p53 = por %p51, %p52
      %s55 = sadd.s32 %s54, 1
      %p58 = scmp.eq.s32.totalorder %s20, 1
      %p59 = scmp.ne.s32.totalorder %s54, %s56
      %p60 = scmp.eq.s32.totalorder %s20, 0
      %p61 = por %p59, %p60
      %p62 = scmp.ne.s32.totalorder %s54, %s56
      %p63 = scmp.eq.s32.totalorder %s25, 1
      %p64 = por %p62, %p63
      %p65 = scmp.ne.s32.totalorder %s56, %s57
      %p66 = scmp.eq.s32.totalorder %s25, 0
      %p67 = por %p65, %p66
      %p68 = scmp.ne.s32.totalorder %s56, %s57
      %p69 = scmp.eq.s32.totalorder %s26, 1
      %p70 = por %p68, %p69
      %p72 = scmp.ne.s32.totalorder %s57, %s71
      %p73 = scmp.eq.s32.totalorder %s26, 0
      %p74 = por %p72, %p73
      %s76 = sadd.s32 %s75, 1
      %p79 = scmp.eq.s32.totalorder %s20, 1
      %p80 = scmp.ne.s32.totalorder %s75, %s77
      %p81 = scmp.eq.s32.totalorder %s20, 0
      %p82 = por %p80, %p81
      %p83 = scmp.ne.s32.totalorder %s75, %s77
      %p84 = scmp.eq.s32.totalorder %s25, 1
      %p85 = por %p83, %p84
      %p86 = scmp.ne.s32.totalorder %s77, %s78
      %p87 = scmp.eq.s32.totalorder %s25, 0
      %p88 = por %p86, %p87
      %p89 = scmp.ne.s32.totalorder %s77, %s78
      %p90 = scmp.eq.s32.totalorder %s26, 1
      %p91 = por %p89, %p90
      %p93 = scmp.ne.s32.totalorder %s78, %s92
      %p94 = scmp.eq.s32.totalorder %s26, 0
      %p95 = por %p93, %p94
      %s97 = sadd.s32 %s96, 1
      %p100 = scmp.eq.s32.totalorder %s20, 1
      %p101 = scmp.ne.s32.totalorder %s96, %s98
      %p102 = scmp.eq.s32.totalorder %s20, 0
      %p103 = por %p101, %p102
      %p104 = scmp.ne.s32.totalorder %s96, %s98
      %p105 = scmp.eq.s32.totalorder %s25, 1
      %p106 = por %p104, %p105
      %p107 = scmp.ne.s32.totalorder %s98, %s99
      %p108 = scmp.eq.s32.totalorder %s25, 0
      %p109 = por %p107, %p108
      %p110 = scmp.ne.s32.totalorder %s98, %s99
      %p111 = scmp.eq.s32.totalorder %s26, 1
      %p112 = por %p110, %p111
      %p114 = scmp.ne.s32.totalorder %s99, %s113
      %p115 = scmp.eq.s32.totalorder %s26, 0
      %p116 = por %p114, %p115
      %s118 = sadd.s32 %s117, 1
      %p121 = scmp.eq.s32.totalorder %s20, 1
      %p122 = scmp.ne.s32.totalorder %s117, %s119
      %p123 = scmp.eq.s32.totalorder %s20, 0
      %p124 = por %p122, %p123
      %p125 = scmp.ne.s32.totalorder %s117, %s119
      %p126 = scmp.eq.s32.totalorder %s25, 1
      %p127 = por %p125, %p126
      %p128 = scmp.ne.s32.totalorder %s119, %s120
      %p129 = scmp.eq.s32.totalorder %s25, 0
      %p130 = por %p128, %p129
      %p131 = scmp.ne.s32.totalorder %s119, %s120
      %p132 = scmp.eq.s32.totalorder %s26, 1
      %p133 = por %p131, %p132
      %p135 = scmp.ne.s32.totalorder %s120, %s134
      %p136 = scmp.eq.s32.totalorder %s26, 0
      %p137 = por %p135, %p136
      %s139 = sadd.s32 %s138, 1
      %p142 = scmp.eq.s32.totalorder %s20, 1
      %p143 = scmp.ne.s32.totalorder %s138, %s140
      %p144 = scmp.eq.s32.totalorder %s20, 0
      %p145 = por %p143, %p144
      %p146 = scmp.ne.s32.totalorder %s138, %s140
      %p147 = scmp.eq.s32.totalorder %s25, 1
      %p148 = por %p146, %p147
      %p149 = scmp.ne.s32.totalorder %s140, %s141
      %p150 = scmp.eq.s32.totalorder %s25, 0
      %p151 = por %p149, %p150
      %p152 = scmp.ne.s32.totalorder %s140, %s141
      %p153 = scmp.eq.s32.totalorder %s26, 1
      %p154 = por %p152, %p153
      %p156 = scmp.ne.s32.totalorder %s141, %s155
      %p157 = scmp.eq.s32.totalorder %s26, 0
      %p158 = por %p156, %p157
      %s160 = sadd.s32 %s159, 1
      %p163 = scmp.eq.s32.totalorder %s20, 1
      %p164 = scmp.ne.s32.totalorder %s159, %s161
      %p165 = scmp.eq.s32.totalorder %s20, 0
      %p166 = por %p164, %p165
      %p167 = scmp.ne.s32.totalorder %s159, %s161
      %p168 = scmp.eq.s32.totalorder %s25, 1
      %p169 = por %p167, %p168
      %p170 = scmp.ne.s32.totalorder %s161, %s162
      %p171 = scmp.eq.s32.totalorder %s25, 0
      %p172 = por %p170, %p171
      %p173 = scmp.ne.s32.totalorder %s161, %s162
      %p174 = scmp.eq.s32.totalorder %s26, 1
      %p175 = por %p173, %p174
      %p177 = scmp.ne.s32.totalorder %s162, %s176
      %p178 = scmp.eq.s32.totalorder %s26, 0
      %p179 = por %p177, %p178
      %s181 = sadd.s32 %s180, 1
      %p184 = scmp.eq.s32.totalorder %s20, 1
      %p185 = scmp.ne.s32.totalorder %s180, %s182
      %p186 = scmp.eq.s32.totalorder %s20, 0
      %p187 = por %p185, %p186
      %p188 = scmp.ne.s32.totalorder %s180, %s182
      %p189 = scmp.eq.s32.totalorder %s25, 1
      %p190 = por %p188, %p189
      %p191 = scmp.ne.s32.totalorder %s182, %s183
      %p192 = scmp.eq.s32.totalorder %s25, 0
      %p193 = por %p191, %p192
      %p194 = scmp.ne.s32.totalorder %s182, %s183
      %p195 = scmp.eq.s32.totalorder %s26, 1
      %p196 = por %p194, %p195
      %p198 = scmp.ne.s32.totalorder %s183, %s197
      %p199 = scmp.eq.s32.totalorder %s26, 0
      %p200 = por %p198, %p199
      %s202 = sadd.s32 %s201, 1
      %p205 = scmp.eq.s32.totalorder %s20, 1
      %p206 = scmp.ne.s32.totalorder %s201, %s203
      %p207 = scmp.eq.s32.totalorder %s20, 0
      %p208 = por %p206, %p207
      %p209 = scmp.ne.s32.totalorder %s201, %s203
      %p210 = scmp.eq.s32.totalorder %s25, 1
      %p211 = por %p209, %p210
      %p212 = scmp.ne.s32.totalorder %s203, %s204
      %p213 = scmp.eq.s32.totalorder %s25, 0
      %p214 = por %p212, %p213
      %p215 = scmp.ne.s32.totalorder %s203, %s204
      %p216 = scmp.eq.s32.totalorder %s26, 1
      %p217 = por %p215, %p216
      %p219 = scmp.ne.s32.totalorder %s204, %s218
      %p220 = scmp.eq.s32.totalorder %s26, 0
      %p221 = por %p219, %p220
      %s223 = sadd.s32 %s222, 1
      %p226 = scmp.eq.s32.totalorder %s20, 1
      %p227 = scmp.ne.s32.totalorder %s222, %s224
      %p228 = scmp.eq.s32.totalorder %s20, 0
      %p229 = por %p227, %p228
      %p230 = scmp.ne.s32.totalorder %s222, %s224
      %p231 = scmp.eq.s32.totalorder %s25, 1
      %p232 = por %p230, %p231
      %p233 = scmp.ne.s32.totalorder %s224, %s225
      %p234 = scmp.eq.s32.totalorder %s25, 0
      %p235 = por %p233, %p234
      %p236 = scmp.ne.s32.totalorder %s224, %s225
      %p237 = scmp.eq.s32.totalorder %s26, 1
      %p238 = por %p236, %p237
      %p240 = scmp.ne.s32.totalorder %s225, %s239
      %p241 = scmp.eq.s32.totalorder %s26, 0
      %p242 = por %p240, %p241
      %s244 = sadd.s32 %s243, 1
      %p247 = scmp.eq.s32.totalorder %s20, 1
      %p248 = scmp.ne.s32.totalorder %s243, %s245
      %p249 = scmp.eq.s32.totalorder %s20, 0
      %p250 = por %p248, %p249
      %p251 = scmp.ne.s32.totalorder %s243, %s245
      %p252 = scmp.eq.s32.totalorder %s25, 1
      %p253 = por %p251, %p252
      %p254 = scmp.ne.s32.totalorder %s245, %s246
      %p255 = scmp.eq.s32.totalorder %s25, 0
      %p256 = por %p254, %p255
      %p257 = scmp.ne.s32.totalorder %s245, %s246
      %p258 = scmp.eq.s32.totalorder %s26, 1
      %p259 = por %p257, %p258
      %p261 = scmp.ne.s32.totalorder %s246, %s260
      %p262 = scmp.eq.s32.totalorder %s26, 0
      %p263 = por %p261, %p262
      %s264 = ssub.s32 %s20, %s27
      %p265 = scmp.eq.s32.totalorder %s264, 0
      %s267 = sadd.s32 %s266, 1
      %s268 = scalar_select %p265, %s266, %s267
      %p271 = pneg %p265
      %p272 = scmp.eq.s32.totalorder %s20, 1
      %p273 = por %p271, %p272
      %p274 = scmp.ne.s32.totalorder %s266, %s269
      %p275 = scmp.eq.s32.totalorder %s20, 0
      %p276 = por %p274, %p275
      %p277 = scmp.ne.s32.totalorder %s266, %s269
      %p278 = scmp.eq.s32.totalorder %s25, 1
      %p279 = por %p277, %p278
      %p280 = scmp.ne.s32.totalorder %s269, %s270
      %p281 = scmp.eq.s32.totalorder %s25, 0
      %p282 = por %p280, %p281
      %p283 = scmp.ne.s32.totalorder %s269, %s270
      %p284 = scmp.eq.s32.totalorder %s26, 1
      %p285 = por %p283, %p284
      %p287 = scmp.ne.s32.totalorder %s270, %s286
      %p288 = scmp.eq.s32.totalorder %s26, 0
      %p289 = por %p287, %p288
      %p290 = scmp.le.s32.totalorder 1, %s20
      %p291 = scmp.lt.s32.totalorder %s20, 3
      %p292 = pnand %p290, %p291
      %p293 = pneg %p292
      // Predicated region
      $region9: #{tpu_custom_call.1} parent=5 // pred_check
        _
      $region10: #{tpu_custom_call.1} parent=5 // pred_check_branch
        %295 = sbr.rel (%p292) target = $region12
      $region11: #{tpu_custom_call.1} parent=5 // pred_region
        %s296 = ssub.s32 %s20, 1
        // Predicated region
        $region13: #{tpu_custom_call.1} parent=11 // pred_check
          %p297 = pneg %p67
        $region14: #{tpu_custom_call.1} parent=11 // pred_check_branch
          %299 = sbr.rel (%p297) target = $region16
        $region15: #{tpu_custom_call.1} parent=11 // pred_region
          _
        $region16: #{tpu_custom_call.1} parent=11 // pred_fallthru
          _
        // Predicated region
        $region17: #{tpu_custom_call.1} parent=11 // pred_check
          %p300 = pneg %p88
        $region18: #{tpu_custom_call.1} parent=11 // pred_check_branch
          %302 = sbr.rel (%p300) target = $region20
        $region19: #{tpu_custom_call.1} parent=11 // pred_region
          _
        $region20: #{tpu_custom_call.1} parent=11 // pred_fallthru
          _
        // Predicated region
        $region21: #{tpu_custom_call.1} parent=11 // pred_check
          %p303 = pneg %p109
        $region22: #{tpu_custom_call.1} parent=11 // pred_check_branch
          %305 = sbr.rel (%p303) target = $region24
        $region23: #{tpu_custom_call.1} parent=11 // pred_region
          _
        $region24: #{tpu_custom_call.1} parent=11 // pred_fallthru
          _
        // Predicated region
        $region25: #{tpu_custom_call.1} parent=11 // pred_check
          %p306 = pneg %p130
        $region26: #{tpu_custom_call.1} parent=11 // pred_check_branch
          %308 = sbr.rel (%p306) target = $region28
        $region27: #{tpu_custom_call.1} parent=11 // pred_region
          _
        $region28: #{tpu_custom_call.1} parent=11 // pred_fallthru
          _
        // Predicated region
        $region29: #{tpu_custom_call.1} parent=11 // pred_check
          %p309 = pneg %p151
        $region30: #{tpu_custom_call.1} parent=11 // pred_check_branch
          %311 = sbr.rel (%p309) target = $region32
        $region31: #{tpu_custom_call.1} parent=11 // pred_region
          _
        $region32: #{tpu_custom_call.1} parent=11 // pred_fallthru
          _
        // Predicated region
        $region33: #{tpu_custom_call.1} parent=11 // pred_check
          %p312 = pneg %p172
        $region34: #{tpu_custom_call.1} parent=11 // pred_check_branch
          %314 = sbr.rel (%p312) target = $region36
        $region35: #{tpu_custom_call.1} parent=11 // pred_region
          _
        $region36: #{tpu_custom_call.1} parent=11 // pred_fallthru
          _
        // Predicated region
        $region37: #{tpu_custom_call.1} parent=11 // pred_check
          %p315 = pneg %p193
        $region38: #{tpu_custom_call.1} parent=11 // pred_check_branch
          %317 = sbr.rel (%p315) target = $region40
        $region39: #{tpu_custom_call.1} parent=11 // pred_region
          _
        $region40: #{tpu_custom_call.1} parent=11 // pred_fallthru
          _
        // Predicated region
        $region41: #{tpu_custom_call.1} parent=11 // pred_check
          %p318 = pneg %p214
        $region42: #{tpu_custom_call.1} parent=11 // pred_check_branch
          %320 = sbr.rel (%p318) target = $region44
        $region43: #{tpu_custom_call.1} parent=11 // pred_region
          _
        $region44: #{tpu_custom_call.1} parent=11 // pred_fallthru
          _
        // Predicated region
        $region45: #{tpu_custom_call.1} parent=11 // pred_check
          %p321 = pneg %p235
        $region46: #{tpu_custom_call.1} parent=11 // pred_check_branch
          %323 = sbr.rel (%p321) target = $region48
        $region47: #{tpu_custom_call.1} parent=11 // pred_region
          _
        $region48: #{tpu_custom_call.1} parent=11 // pred_fallthru
          _
        // Predicated region
        $region49: #{tpu_custom_call.1} parent=11 // pred_check
          %p324 = pneg %p256
        $region50: #{tpu_custom_call.1} parent=11 // pred_check_branch
          %326 = sbr.rel (%p324) target = $region52
        $region51: #{tpu_custom_call.1} parent=11 // pred_region
          _
        $region52: #{tpu_custom_call.1} parent=11 // pred_fallthru
          _
      $region12: #{tpu_custom_call.1} parent=5 // pred_fallthru
        _
      %p327 = scmp.lt.s32.totalorder %s20, 2
      // Predicated region
      $region53: #{tpu_custom_call.1} parent=5 // pred_check
        %p328 = pneg %p327
      $region54: #{tpu_custom_call.1} parent=5 // pred_check_branch
        %330 = sbr.rel (%p328) target = $region56
      $region55: #{tpu_custom_call.1} parent=5 // pred_region
        // Predicated region
        $region57: #{tpu_custom_call.1} parent=55 // pred_check
          %p331 = pneg %p40
        $region58: #{tpu_custom_call.1} parent=55 // pred_check_branch
          %333 = sbr.rel (%p331) target = $region60
        $region59: #{tpu_custom_call.1} parent=55 // pred_region
          %p334 = scmp.lt.s32.totalorder %s20, 1
          %s335 = scalar_select %p334, %s20, 1
          %s336 = smul.addr %s335, 8
          %s337 = smul.addr %s336, 8
          %s338 = scalar_lea.vmem %s0, %s337
        $region60: #{tpu_custom_call.1} parent=55 // pred_fallthru
          _
      $region56: #{tpu_custom_call.1} parent=5 // pred_fallthru
        _
      %p339 = scmp.le.s32.totalorder 1, %s20
      %p340 = scmp.lt.s32.totalorder %s20, 3
      %p341 = pnand %p339, %p340
      %p342 = pneg %p341
      // Predicated region
      $region61: #{tpu_custom_call.1} parent=5 // pred_check
        _
      $region62: #{tpu_custom_call.1} parent=5 // pred_check_branch
        %344 = sbr.rel (%p341) target = $region64
      $region63: #{tpu_custom_call.1} parent=5 // pred_region
        %s345 = ssub.s32 %s20, 1
        %p346 = scmp.lt.s32.totalorder %s25, 1
        %s347 = scalar_select %p346, %s25, 1
        %s348 = smul.addr %s347, 8
        %s349 = smul.addr %s348, 8
        %s350 = scalar_lea.vmem %s0, %s349
        %p351 = pneg %p46
        %p352 = pneg %p43
        %p353 = pneg %p67
        %p354 = pneg %p64
        %p355 = pneg %p88
        %p356 = pneg %p85
        %p357 = pneg %p109
        %p358 = pneg %p106
        %p359 = pneg %p130
        %p360 = pneg %p127
        %p361 = pneg %p151
        %p362 = pneg %p148
        %p363 = pneg %p172
        %p364 = pneg %p169
        %p365 = pneg %p193
        %p366 = pneg %p190
        %p367 = pneg %p214
        %p368 = pneg %p211
        %p369 = pneg %p235
        %p370 = pneg %p232
        %p371 = pneg %p256
        %p372 = pneg %p253
        %p373 = pneg %p282
        %p374 = pneg %p279
        %s375 = sand.u32 %s269, 1
        %s376 = scalar_lea.sflag [#allocation3], %s375
        %s377 = sand.u32 %s269, 1
        %s378 = scalar_lea.vmem [#allocation2], %s377
        %p379 = scmp.lt.s32.totalorder %s25, 1
        %s380 = scalar_select %p379, %s25, 1
        %s381 = smul.addr %s380, 8
        %s382 = smul.addr %s381, 8
        %s383 = scalar_lea.vmem %s0, %s382
        %v384 = vld [vmem:[%s383] sm:$0xff]
        %v385 = vld [vmem:[%s383 + $0x8] sm:$0xff]
        %v386 = vld [vmem:[%s383 + $0x10] sm:$0xff]
        %v387 = vld [vmem:[%s383 + $0x18] sm:$0xff]
        %v388 = vld [vmem:[%s383 + $0x20] sm:$0xff]
        %v389 = vld [vmem:[%s383 + $0x28] sm:$0xff]
        %v390 = vld [vmem:[%s383 + $0x30] sm:$0xff]
        %v391 = vld [vmem:[%s383 + $0x38] sm:$0xff]
        %v392 = vld [vmem:[%s1] sm:$0xff]
        %v393 = vld [vmem:[%s1 + $0x8] sm:$0xff]
        %v394 = vld [vmem:[%s1 + $0x10] sm:$0xff]
        %v395 = vld [vmem:[%s1 + $0x18] sm:$0xff]
        %v396 = vld [vmem:[%s1 + $0x20] sm:$0xff]
        %v397 = vld [vmem:[%s1 + $0x28] sm:$0xff]
        %v398 = vld [vmem:[%s1 + $0x30] sm:$0xff]
        %v399 = vld [vmem:[%s1 + $0x38] sm:$0xff]
        %v400 = vld [vmem:[%s1 + $0x40] sm:$0xff]
        %v401 = vld [vmem:[%s1 + $0x48] sm:$0xff]
        %v402 = vld [vmem:[%s1 + $0x50] sm:$0xff]
        %v403 = vld [vmem:[%s1 + $0x58] sm:$0xff]
        %v404 = vld [vmem:[%s1 + $0x60] sm:$0xff]
        %v405 = vld [vmem:[%s1 + $0x68] sm:$0xff]
        %v406 = vld [vmem:[%s1 + $0x70] sm:$0xff]
        %v407 = vld [vmem:[%s1 + $0x78] sm:$0xff]
        %vm408 = vcmask 523264
        %v410 = vsel %vm408, %v392, 0
        %v413 = vsel %vm408, %v393, 0
        %v416 = vsel %vm408, %v394, 0
        %v419 = vsel %vm408, %v395, 0
        %v422 = vsel %vm408, %v396, 0
        %v425 = vsel %vm408, %v397, 0
        %v428 = vsel %vm408, %v398, 0
        %v431 = vsel %vm408, %v399, 0
        %v434 = vsel %vm408, %v400, 0
        %v437 = vsel %vm408, %v401, 0
        %v440 = vsel %vm408, %v402, 0
        %v443 = vsel %vm408, %v403, 0
        %v446 = vsel %vm408, %v404, 0
        %v449 = vsel %vm408, %v405, 0
        %v452 = vsel %vm408, %v406, 0
        %v455 = vsel %vm408, %v407, 0
        %457 = vmatprep.subr.mxu0 0.0
        %458 = vmatpush1.msra.mxu0 %v384
        %459 = vmatprep.subr.mxu0 0.0
        %460 = vmatpush1.msra.mxu0 %v385
        %461 = vmatprep.subr.mxu0 0.0
        %462 = vmatpush1.msra.mxu0 %v386
        %463 = vmatprep.subr.mxu0 0.0
        %464 = vmatpush1.msra.mxu0 %v387
        %465 = vmatprep.subr.mxu0 0.0
        %466 = vmatpush1.msra.mxu0 %v388
        %467 = vmatprep.subr.mxu0 0.0
        %468 = vmatpush1.msra.mxu0 %v389
        %469 = vmatprep.subr.mxu0 0.0
        %470 = vmatpush1.msra.mxu0 %v390
        %471 = vmatprep.subr.mxu0 0.0
        %472 = vmatpush1.msra.mxu0 %v391
        %473 = vmatprep.subr.mxu0 0.0
        %474 = vmatpush1.msra.mxu0 0.0
        %475 = vmatprep.subr.mxu0 0.0
        %476 = vmatpush1.msra.mxu0 0.0
        %477 = vmatprep.subr.mxu0 0.0
        %478 = vmatpush1.msra.mxu0 0.0
        %479 = vmatprep.subr.mxu0 0.0
        %480 = vmatpush1.msra.mxu0 0.0
        %481 = vmatprep.subr.mxu0 0.0
        %482 = vmatpush1.msra.mxu0 0.0
        %483 = vmatprep.subr.mxu0 0.0
        %484 = vmatpush1.msra.mxu0 0.0
        %485 = vmatprep.subr.mxu0 0.0
        %486 = vmatpush1.msra.mxu0 0.0
        %487 = vmatprep.subr.mxu0 0.0
        %488 = vmatpush1.msra.mxu0 0.0
        %489 = vmatprep.subr.mxu0 0.0
        %490 = vmatpush1.msra.mxu0 0.0
        %491 = vmatprep.subr.mxu0 0.0
        %492 = vmatpush1.msra.mxu0 0.0
        %493 = vmatprep.subr.mxu0 0.0
        %494 = vmatpush1.msra.mxu0 0.0
        %495 = vmatprep.subr.mxu0 0.0
        %496 = vmatpush1.msra.mxu0 0.0
        %497 = vmatprep.subr.mxu0 0.0
        %498 = vmatpush1.msra.mxu0 0.0
        %499 = vmatprep.subr.mxu0 0.0
        %500 = vmatpush1.msra.mxu0 0.0
        %501 = vmatprep.subr.mxu0 0.0
        %502 = vmatpush1.msra.mxu0 0.0
        %503 = vmatprep.subr.mxu0 0.0
        %504 = vmatpush1.msra.mxu0 0.0
        %505 = vmatprep.subr.mxu0 0.0
        %506 = vmatpush1.msra.mxu0 0.0
        %507 = vmatprep.subr.mxu0 0.0
        %508 = vmatpush1.msra.mxu0 0.0
        %509 = vmatprep.subr.mxu0 0.0
        %510 = vmatpush1.msra.mxu0 0.0
        %511 = vmatprep.subr.mxu0 0.0
        %512 = vmatpush1.msra.mxu0 0.0
        %513 = vmatprep.subr.mxu0 0.0
        %514 = vmatpush1.msra.mxu0 0.0
        %515 = vmatprep.subr.mxu0 0.0
        %516 = vmatpush1.msra.mxu0 0.0
        %517 = vmatprep.subr.mxu0 0.0
        %518 = vmatpush1.msra.mxu0 0.0
        %519 = vmatprep.subr.mxu0 0.0
        %520 = vmatpush1.msra.mxu0 0.0
        %521 = vmatprep.mubr.f32.mxu0 0.0
        %522 = vmatmul.mubr.f32.gmra.mrb[0].mxu0 %v410
        %v523 = vpop.f32.mrb[0].mxu0
        %v524 = vadd.f32 0.0, %v523
        %v525 = vpop.f32.mrb[0].mxu0
        %526 = vmatprep.mubr.f32.mxu0 0.0
        %527 = vmatmul.mubr.f32.gmra.mrb[0].mxu0 %v413
        %v528 = vpop.f32.mrb[0].mxu0
        %v529 = vadd.f32 0.0, %v528
        %v530 = vpop.f32.mrb[0].mxu0
        %531 = vmatprep.mubr.f32.mxu0 0.0
        %532 = vmatmul.mubr.f32.gmra.mrb[0].mxu0 %v416
        %v533 = vpop.f32.mrb[0].mxu0
        %v534 = vadd.f32 0.0, %v533
        %v535 = vpop.f32.mrb[0].mxu0
        %536 = vmatprep.mubr.f32.mxu0 0.0
        %537 = vmatmul.mubr.f32.gmra.mrb[0].mxu0 %v419
        %v538 = vpop.f32.mrb[0].mxu0
        %v539 = vadd.f32 0.0, %v538
        %v540 = vpop.f32.mrb[0].mxu0
        %541 = vmatprep.mubr.f32.mxu0 0.0
        %542 = vmatmul.mubr.f32.gmra.mrb[0].mxu0 %v422
        %v543 = vpop.f32.mrb[0].mxu0
        %v544 = vadd.f32 0.0, %v543
        %v545 = vpop.f32.mrb[0].mxu0
        %546 = vmatprep.mubr.f32.mxu0 0.0
        %547 = vmatmul.mubr.f32.gmra.mrb[0].mxu0 %v425
        %v548 = vpop.f32.mrb[0].mxu0
        %v549 = vadd.f32 0.0, %v548
        %v550 = vpop.f32.mrb[0].mxu0
        %551 = vmatprep.mubr.f32.mxu0 0.0
        %552 = vmatmul.mubr.f32.gmra.mrb[0].mxu0 %v428
        %v553 = vpop.f32.mrb[0].mxu0
        %v554 = vadd.f32 0.0, %v553
        %v555 = vpop.f32.mrb[0].mxu0
        %556 = vmatprep.mubr.f32.mxu0 0.0
        %557 = vmatmul.mubr.f32.gmra.mrb[0].mxu0 %v431
        %v558 = vpop.f32.mrb[0].mxu0
        %v559 = vadd.f32 0.0, %v558
        %v560 = vpop.f32.mrb[0].mxu0
        %561 = vmatprep.mubr.f32.mxu0 0.0
        %562 = vmatmul.mubr.f32.gmra.mrb[0].mxu0 %v434
        %v563 = vpop.f32.mrb[0].mxu0
        %v564 = vadd.f32 0.0, %v563
        %v565 = vpop.f32.mrb[0].mxu0
        %566 = vmatprep.mubr.f32.mxu0 0.0
        %567 = vmatmul.mubr.f32.gmra.mrb[0].mxu0 %v437
        %v568 = vpop.f32.mrb[0].mxu0
        %v569 = vadd.f32 0.0, %v568
        %v570 = vpop.f32.mrb[0].mxu0
        %571 = vmatprep.mubr.f32.mxu0 0.0
        %572 = vmatmul.mubr.f32.gmra.mrb[0].mxu0 %v440
        %v573 = vpop.f32.mrb[0].mxu0
        %v574 = vadd.f32 0.0, %v573
        %v575 = vpop.f32.mrb[0].mxu0
        %576 = vmatprep.mubr.f32.mxu0 0.0
        %577 = vmatmul.mubr.f32.gmra.mrb[0].mxu0 %v443
        %v578 = vpop.f32.mrb[0].mxu0
        %v579 = vadd.f32 0.0, %v578
        %v580 = vpop.f32.mrb[0].mxu0
        %581 = vmatprep.mubr.f32.mxu0 0.0
        %582 = vmatmul.mubr.f32.gmra.mrb[0].mxu0 %v446
        %v583 = vpop.f32.mrb[0].mxu0
        %v584 = vadd.f32 0.0, %v583
        %v585 = vpop.f32.mrb[0].mxu0
        %586 = vmatprep.mubr.f32.mxu0 0.0
        %587 = vmatmul.mubr.f32.gmra.mrb[0].mxu0 %v449
        %v588 = vpop.f32.mrb[0].mxu0
        %v589 = vadd.f32 0.0, %v588
        %v590 = vpop.f32.mrb[0].mxu0
        %591 = vmatprep.mubr.f32.mxu0 0.0
        %592 = vmatmul.mubr.f32.gmra.mrb[0].mxu0 %v452
        %v593 = vpop.f32.mrb[0].mxu0
        %v594 = vadd.f32 0.0, %v593
        %v595 = vpop.f32.mrb[0].mxu0
        %596 = vmatprep.mubr.f32.mxu0 0.0
        %597 = vmatmul.mubr.f32.gmra.mrb[0].mxu0 %v455
        %v598 = vpop.f32.mrb[0].mxu0
        %v599 = vadd.f32 0.0, %v598
        %v600 = vpop.f32.mrb[0].mxu0
        %601 = vdwg.mxu0
        %v602 = vld [vmem:[%s2] sm:$0x7]
        %s603 = scalar_lea.vmem %s2, 4
        %v604 = vld [vmem:[%s603] sm:$0x7]
        %vm605 = vcmask 23552
        %v607 = vsel %vm605, %v544, 0
        %v610 = vsel %vm605, %v549, 0
        %v613 = vsel %vm605, %v554, 0
        %v616 = vsel %vm605, %v559, 0
        %vm618 = vcmask 1042432
        %v620 = vsel %vm618, %v604, 0
        %622 = vmatprep.subr.mxu0 0.0
        %623 = vmatpush1.msra.mxu0 %v620
        %624 = vmatprep.subr.mxu0 0.0
        %625 = vmatpush1.msra.mxu0 0.0
        %626 = vmatprep.subr.mxu0 0.0
        %627 = vmatpush1.msra.mxu0 0.0
        %628 = vmatprep.subr.mxu0 0.0
        %629 = vmatpush1.msra.mxu0 0.0
        %630 = vmatprep.subr.mxu0 0.0
        %631 = vmatpush1.msra.mxu0 0.0
        %632 = vmatprep.subr.mxu0 0.0
        %633 = vmatpush1.msra.mxu0 0.0
        %634 = vmatprep.subr.mxu0 0.0
        %635 = vmatpush1.msra.mxu0 0.0
        %636 = vmatprep.subr.mxu0 0.0
        %637 = vmatpush1.msra.mxu0 0.0
        %638 = vmatprep.subr.mxu0 0.0
        %639 = vmatpush1.msra.mxu0 0.0
        %640 = vmatprep.subr.mxu0 0.0
        %641 = vmatpush1.msra.mxu0 0.0
        %642 = vmatprep.subr.mxu0 0.0
        %643 = vmatpush1.msra.mxu0 0.0
        %644 = vmatprep.subr.mxu0 0.0
        %645 = vmatpush1.msra.mxu0 0.0
        %646 = vmatprep.subr.mxu0 0.0
        %647 = vmatpush1.msra.mxu0 0.0
        %648 = vmatprep.subr.mxu0 0.0
        %649 = vmatpush1.msra.mxu0 0.0
        %650 = vmatprep.subr.mxu0 0.0
        %651 = vmatpush1.msra.mxu0 0.0
        %652 = vmatprep.subr.mxu0 0.0
        %653 = vmatpush1.msra.mxu0 0.0
        %654 = vmatprep.subr.mxu0 0.0
        %655 = vmatpush1.msra.mxu0 0.0
        %656 = vmatprep.subr.mxu0 0.0
        %657 = vmatpush1.msra.mxu0 0.0
        %658 = vmatprep.subr.mxu0 0.0
        %659 = vmatpush1.msra.mxu0 0.0
        %660 = vmatprep.subr.mxu0 0.0
        %661 = vmatpush1.msra.mxu0 0.0
        %662 = vmatprep.subr.mxu0 0.0
        %663 = vmatpush1.msra.mxu0 0.0
        %664 = vmatprep.subr.mxu0 0.0
        %665 = vmatpush1.msra.mxu0 0.0
        %666 = vmatprep.subr.mxu0 0.0
        %667 = vmatpush1.msra.mxu0 0.0
        %668 = vmatprep.subr.mxu0 0.0
        %669 = vmatpush1.msra.mxu0 0.0
        %670 = vmatprep.subr.mxu0 0.0
        %671 = vmatpush1.msra.mxu0 0.0
        %672 = vmatprep.subr.mxu0 0.0
        %673 = vmatpush1.msra.mxu0 0.0
        %674 = vmatprep.subr.mxu0 0.0
        %675 = vmatpush1.msra.mxu0 0.0
        %676 = vmatprep.subr.mxu0 0.0
        %677 = vmatpush1.msra.mxu0 0.0
        %678 = vmatprep.subr.mxu0 0.0
        %679 = vmatpush1.msra.mxu0 0.0
        %680 = vmatprep.subr.mxu0 0.0
        %681 = vmatpush1.msra.mxu0 0.0
        %682 = vmatprep.subr.mxu0 0.0
        %683 = vmatpush1.msra.mxu0 0.0
        %684 = vmatprep.subr.mxu0 0.0
        %685 = vmatpush1.msra.mxu0 0.0
        %686 = vmatprep.mubr.f32.mxu0 0.0
        %687 = vmatmul.mubr.f32.gmra.mrb[0].mxu0 %v607
        %v688 = vpop.f32.mrb[0].mxu0
        %v689 = vadd.f32 0.0, %v688
        %v690 = vpop.f32.mrb[0].mxu0
        %691 = vmatprep.mubr.f32.mxu0 0.0
        %692 = vmatmul.mubr.f32.gmra.mrb[0].mxu0 %v610
        %v693 = vpop.f32.mrb[0].mxu0
        %v694 = vadd.f32 0.0, %v693
        %v695 = vpop.f32.mrb[0].mxu0
        %696 = vmatprep.mubr.f32.mxu0 0.0
        %697 = vmatmul.mubr.f32.gmra.mrb[0].mxu0 %v613
        %v698 = vpop.f32.mrb[0].mxu0
        %v699 = vadd.f32 0.0, %v698
        %v700 = vpop.f32.mrb[0].mxu0
        %701 = vmatprep.mubr.f32.mxu0 0.0
        %702 = vmatmul.mubr.f32.gmra.mrb[0].mxu0 %v616
        %v703 = vpop.f32.mrb[0].mxu0
        %v704 = vadd.f32 0.0, %v703
        %v705 = vpop.f32.mrb[0].mxu0
        %706 = vdwg.mxu0
        %v708 = vsel %vm605, %v524, 0
        %v711 = vsel %vm605, %v529, 0
        %v714 = vsel %vm605, %v534, 0
        %v717 = vsel %vm605, %v539, 0
        %v720 = vsel %vm618, %v602, 0
        %722 = vmatprep.subr.mxu0 0.0
        %723 = vmatpush1.msra.mxu0 %v720
        %724 = vmatprep.subr.mxu0 0.0
        %725 = vmatpush1.msra.mxu0 0.0
        %726 = vmatprep.subr.mxu0 0.0
        %727 = vmatpush1.msra.mxu0 0.0
        %728 = vmatprep.subr.mxu0 0.0
        %729 = vmatpush1.msra.mxu0 0.0
        %730 = vmatprep.subr.mxu0 0.0
        %731 = vmatpush1.msra.mxu0 0.0
        %732 = vmatprep.subr.mxu0 0.0
        %733 = vmatpush1.msra.mxu0 0.0
        %734 = vmatprep.subr.mxu0 0.0
        %735 = vmatpush1.msra.mxu0 0.0
        %736 = vmatprep.subr.mxu0 0.0
        %737 = vmatpush1.msra.mxu0 0.0
        %738 = vmatprep.subr.mxu0 0.0
        %739 = vmatpush1.msra.mxu0 0.0
        %740 = vmatprep.subr.mxu0 0.0
        %741 = vmatpush1.msra.mxu0 0.0
        %742 = vmatprep.subr.mxu0 0.0
        %743 = vmatpush1.msra.mxu0 0.0
        %744 = vmatprep.subr.mxu0 0.0
        %745 = vmatpush1.msra.mxu0 0.0
        %746 = vmatprep.subr.mxu0 0.0
        %747 = vmatpush1.msra.mxu0 0.0
        %748 = vmatprep.subr.mxu0 0.0
        %749 = vmatpush1.msra.mxu0 0.0
        %750 = vmatprep.subr.mxu0 0.0
        %751 = vmatpush1.msra.mxu0 0.0
        %752 = vmatprep.subr.mxu0 0.0
        %753 = vmatpush1.msra.mxu0 0.0
        %754 = vmatprep.subr.mxu0 0.0
        %755 = vmatpush1.msra.mxu0 0.0
        %756 = vmatprep.subr.mxu0 0.0
        %757 = vmatpush1.msra.mxu0 0.0
        %758 = vmatprep.subr.mxu0 0.0
        %759 = vmatpush1.msra.mxu0 0.0
        %760 = vmatprep.subr.mxu0 0.0
        %761 = vmatpush1.msra.mxu0 0.0
        %762 = vmatprep.subr.mxu0 0.0
        %763 = vmatpush1.msra.mxu0 0.0
        %764 = vmatprep.subr.mxu0 0.0
        %765 = vmatpush1.msra.mxu0 0.0
        %766 = vmatprep.subr.mxu0 0.0
        %767 = vmatpush1.msra.mxu0 0.0
        %768 = vmatprep.subr.mxu0 0.0
        %769 = vmatpush1.msra.mxu0 0.0
        %770 = vmatprep.subr.mxu0 0.0
        %771 = vmatpush1.msra.mxu0 0.0
        %772 = vmatprep.subr.mxu0 0.0
        %773 = vmatpush1.msra.mxu0 0.0
        %774 = vmatprep.subr.mxu0 0.0
        %775 = vmatpush1.msra.mxu0 0.0
        %776 = vmatprep.subr.mxu0 0.0
        %777 = vmatpush1.msra.mxu0 0.0
        %778 = vmatprep.subr.mxu0 0.0
        %779 = vmatpush1.msra.mxu0 0.0
        %780 = vmatprep.subr.mxu0 0.0
        %781 = vmatpush1.msra.mxu0 0.0
        %782 = vmatprep.subr.mxu0 0.0
        %783 = vmatpush1.msra.mxu0 0.0
        %784 = vmatprep.subr.mxu0 0.0
        %785 = vmatpush1.msra.mxu0 0.0
        %786 = vmatprep.mubr.f32.mxu0 0.0
        %787 = vmatmul.mubr.f32.gmra.mrb[0].mxu0 %v708
        %v788 = vpop.f32.mrb[0].mxu0
        %v789 = vadd.f32 %v689, %v788
        %v790 = vpop.f32.mrb[0].mxu0
        %791 = vmatprep.mubr.f32.mxu0 0.0
        %792 = vmatmul.mubr.f32.gmra.mrb[0].mxu0 %v711
        %v793 = vpop.f32.mrb[0].mxu0
        %v794 = vadd.f32 %v694, %v793
        %v795 = vpop.f32.mrb[0].mxu0
        %796 = vmatprep.mubr.f32.mxu0 0.0
        %797 = vmatmul.mubr.f32.gmra.mrb[0].mxu0 %v714
        %v798 = vpop.f32.mrb[0].mxu0
        %v799 = vadd.f32 %v699, %v798
        %v800 = vpop.f32.mrb[0].mxu0
        %801 = vmatprep.mubr.f32.mxu0 0.0
        %802 = vmatmul.mubr.f32.gmra.mrb[0].mxu0 %v717
        %v803 = vpop.f32.mrb[0].mxu0
        %v804 = vadd.f32 %v704, %v803
        %v805 = vpop.f32.mrb[0].mxu0
        %806 = vdwg.mxu0
        %s807 = scalar_lea.vmem %s2, 8
        %v808 = vld [vmem:[%s807] sm:$0x7]
        %v810 = vsel %vm605, %v564, 0
        %v813 = vsel %vm605, %v569, 0
        %v816 = vsel %vm605, %v574, 0
        %v819 = vsel %vm605, %v579, 0
        %v822 = vsel %vm618, %v808, 0
        %824 = vmatprep.subr.mxu0 0.0
        %825 = vmatpush1.msra.mxu0 %v822
        %826 = vmatprep.subr.mxu0 0.0
        %827 = vmatpush1.msra.mxu0 0.0
        %828 = vmatprep.subr.mxu0 0.0
        %829 = vmatpush1.msra.mxu0 0.0
        %830 = vmatprep.subr.mxu0 0.0
        %831 = vmatpush1.msra.mxu0 0.0
        %832 = vmatprep.subr.mxu0 0.0
        %833 = vmatpush1.msra.mxu0 0.0
        %834 = vmatprep.subr.mxu0 0.0
        %835 = vmatpush1.msra.mxu0 0.0
        %836 = vmatprep.subr.mxu0 0.0
        %837 = vmatpush1.msra.mxu0 0.0
        %838 = vmatprep.subr.mxu0 0.0
        %839 = vmatpush1.msra.mxu0 0.0
        %840 = vmatprep.subr.mxu0 0.0
        %841 = vmatpush1.msra.mxu0 0.0
        %842 = vmatprep.subr.mxu0 0.0
        %843 = vmatpush1.msra.mxu0 0.0
        %844 = vmatprep.subr.mxu0 0.0
        %845 = vmatpush1.msra.mxu0 0.0
        %846 = vmatprep.subr.mxu0 0.0
        %847 = vmatpush1.msra.mxu0 0.0
        %848 = vmatprep.subr.mxu0 0.0
        %849 = vmatpush1.msra.mxu0 0.0
        %850 = vmatprep.subr.mxu0 0.0
        %851 = vmatpush1.msra.mxu0 0.0
        %852 = vmatprep.subr.mxu0 0.0
        %853 = vmatpush1.msra.mxu0 0.0
        %854 = vmatprep.subr.mxu0 0.0
        %855 = vmatpush1.msra.mxu0 0.0
        %856 = vmatprep.subr.mxu0 0.0
        %857 = vmatpush1.msra.mxu0 0.0
        %858 = vmatprep.subr.mxu0 0.0
        %859 = vmatpush1.msra.mxu0 0.0
        %860 = vmatprep.subr.mxu0 0.0
        %861 = vmatpush1.msra.mxu0 0.0
        %862 = vmatprep.subr.mxu0 0.0
        %863 = vmatpush1.msra.mxu0 0.0
        %864 = vmatprep.subr.mxu0 0.0
        %865 = vmatpush1.msra.mxu0 0.0
        %866 = vmatprep.subr.mxu0 0.0
        %867 = vmatpush1.msra.mxu0 0.0
        %868 = vmatprep.subr.mxu0 0.0
        %869 = vmatpush1.msra.mxu0 0.0
        %870 = vmatprep.subr.mxu0 0.0
        %871 = vmatpush1.msra.mxu0 0.0
        %872 = vmatprep.subr.mxu0 0.0
        %873 = vmatpush1.msra.mxu0 0.0
        %874 = vmatprep.subr.mxu0 0.0
        %875 = vmatpush1.msra.mxu0 0.0
        %876 = vmatprep.subr.mxu0 0.0
        %877 = vmatpush1.msra.mxu0 0.0
        %878 = vmatprep.subr.mxu0 0.0
        %879 = vmatpush1.msra.mxu0 0.0
        %880 = vmatprep.subr.mxu0 0.0
        %881 = vmatpush1.msra.mxu0 0.0
        %882 = vmatprep.subr.mxu0 0.0
        %883 = vmatpush1.msra.mxu0 0.0
        %884 = vmatprep.subr.mxu0 0.0
        %885 = vmatpush1.msra.mxu0 0.0
        %886 = vmatprep.subr.mxu0 0.0
        %887 = vmatpush1.msra.mxu0 0.0
        %888 = vmatprep.mubr.f32.mxu0 0.0
        %889 = vmatmul.mubr.f32.gmra.mrb[0].mxu0 %v810
        %v890 = vpop.f32.mrb[0].mxu0
        %v891 = vadd.f32 0.0, %v890
        %v892 = vpop.f32.mrb[0].mxu0
        %893 = vmatprep.mubr.f32.mxu0 0.0
        %894 = vmatmul.mubr.f32.gmra.mrb[0].mxu0 %v813
        %v895 = vpop.f32.mrb[0].mxu0
        %v896 = vadd.f32 0.0, %v895
        %v897 = vpop.f32.mrb[0].mxu0
        %898 = vmatprep.mubr.f32.mxu0 0.0
        %899 = vmatmul.mubr.f32.gmra.mrb[0].mxu0 %v816
        %v900 = vpop.f32.mrb[0].mxu0
        %v901 = vadd.f32 0.0, %v900
        %v902 = vpop.f32.mrb[0].mxu0
        %903 = vmatprep.mubr.f32.mxu0 0.0
        %904 = vmatmul.mubr.f32.gmra.mrb[0].mxu0 %v819
        %v905 = vpop.f32.mrb[0].mxu0
        %v906 = vadd.f32 0.0, %v905
        %v907 = vpop.f32.mrb[0].mxu0
        %908 = vdwg.mxu0
        %v909 = vadd.f32 %v789, %v891
        %v910 = vadd.f32 %v794, %v896
        %v911 = vadd.f32 %v799, %v901
        %v912 = vadd.f32 %v804, %v906
        %s913 = scalar_lea.vmem %s2, 12
        %v914 = vld [vmem:[%s913] sm:$0x7]
        %v916 = vsel %vm605, %v584, 0
        %v919 = vsel %vm605, %v589, 0
        %v922 = vsel %vm605, %v594, 0
        %v925 = vsel %vm605, %v599, 0
        %v928 = vsel %vm618, %v914, 0
        %930 = vmatprep.subr.mxu0 0.0
        %931 = vmatpush1.msra.mxu0 %v928
        %932 = vmatprep.subr.mxu0 0.0
        %933 = vmatpush1.msra.mxu0 0.0
        %934 = vmatprep.subr.mxu0 0.0
        %935 = vmatpush1.msra.mxu0 0.0
        %936 = vmatprep.subr.mxu0 0.0
        %937 = vmatpush1.msra.mxu0 0.0
        %938 = vmatprep.subr.mxu0 0.0
        %939 = vmatpush1.msra.mxu0 0.0
        %940 = vmatprep.subr.mxu0 0.0
        %941 = vmatpush1.msra.mxu0 0.0
        %942 = vmatprep.subr.mxu0 0.0
        %943 = vmatpush1.msra.mxu0 0.0
        %944 = vmatprep.subr.mxu0 0.0
        %945 = vmatpush1.msra.mxu0 0.0
        %946 = vmatprep.subr.mxu0 0.0
        %947 = vmatpush1.msra.mxu0 0.0
        %948 = vmatprep.subr.mxu0 0.0
        %949 = vmatpush1.msra.mxu0 0.0
        %950 = vmatprep.subr.mxu0 0.0
        %951 = vmatpush1.msra.mxu0 0.0
        %952 = vmatprep.subr.mxu0 0.0
        %953 = vmatpush1.msra.mxu0 0.0
        %954 = vmatprep.subr.mxu0 0.0
        %955 = vmatpush1.msra.mxu0 0.0
        %956 = vmatprep.subr.mxu0 0.0
        %957 = vmatpush1.msra.mxu0 0.0
        %958 = vmatprep.subr.mxu0 0.0
        %959 = vmatpush1.msra.mxu0 0.0
        %960 = vmatprep.subr.mxu0 0.0
        %961 = vmatpush1.msra.mxu0 0.0
        %962 = vmatprep.subr.mxu0 0.0
        %963 = vmatpush1.msra.mxu0 0.0
        %964 = vmatprep.subr.mxu0 0.0
        %965 = vmatpush1.msra.mxu0 0.0
        %966 = vmatprep.subr.mxu0 0.0
        %967 = vmatpush1.msra.mxu0 0.0
        %968 = vmatprep.subr.mxu0 0.0
        %969 = vmatpush1.msra.mxu0 0.0
        %970 = vmatprep.subr.mxu0 0.0
        %971 = vmatpush1.msra.mxu0 0.0
        %972 = vmatprep.subr.mxu0 0.0
        %973 = vmatpush1.msra.mxu0 0.0
        %974 = vmatprep.subr.mxu0 0.0
        %975 = vmatpush1.msra.mxu0 0.0
        %976 = vmatprep.subr.mxu0 0.0
        %977 = vmatpush1.msra.mxu0 0.0
        %978 = vmatprep.subr.mxu0 0.0
        %979 = vmatpush1.msra.mxu0 0.0
        %980 = vmatprep.subr.mxu0 0.0
        %981 = vmatpush1.msra.mxu0 0.0
        %982 = vmatprep.subr.mxu0 0.0
        %983 = vmatpush1.msra.mxu0 0.0
        %984 = vmatprep.subr.mxu0 0.0
        %985 = vmatpush1.msra.mxu0 0.0
        %986 = vmatprep.subr.mxu0 0.0
        %987 = vmatpush1.msra.mxu0 0.0
        %988 = vmatprep.subr.mxu0 0.0
        %989 = vmatpush1.msra.mxu0 0.0
        %990 = vmatprep.subr.mxu0 0.0
        %991 = vmatpush1.msra.mxu0 0.0
        %992 = vmatprep.subr.mxu0 0.0
        %993 = vmatpush1.msra.mxu0 0.0
        %994 = vmatprep.mubr.f32.mxu0 0.0
        %995 = vmatmul.mubr.f32.gmra.mrb[0].mxu0 %v916
        %v996 = vpop.f32.mrb[0].mxu0
        %v997 = vadd.f32 0.0, %v996
        %v998 = vpop.f32.mrb[0].mxu0
        %999 = vmatprep.mubr.f32.mxu0 0.0
        %1000 = vmatmul.mubr.f32.gmra.mrb[0].mxu0 %v919
        %v1001 = vpop.f32.mrb[0].mxu0
        %v1002 = vadd.f32 0.0, %v1001
        %v1003 = vpop.f32.mrb[0].mxu0
        %1004 = vmatprep.mubr.f32.mxu0 0.0
        %1005 = vmatmul.mubr.f32.gmra.mrb[0].mxu0 %v922
        %v1006 = vpop.f32.mrb[0].mxu0
        %v1007 = vadd.f32 0.0, %v1006
        %v1008 = vpop.f32.mrb[0].mxu0
        %1009 = vmatprep.mubr.f32.mxu0 0.0
        %1010 = vmatmul.mubr.f32.gmra.mrb[0].mxu0 %v925
        %v1011 = vpop.f32.mrb[0].mxu0
        %v1012 = vadd.f32 0.0, %v1011
        %v1013 = vpop.f32.mrb[0].mxu0
        %1014 = vdwg.mxu0
        %v1015 = vadd.f32 %v909, %v997
        %v1016 = vadd.f32 %v910, %v1002
        %v1017 = vadd.f32 %v911, %v1007
        %v1018 = vadd.f32 %v912, %v1012
        %v1019 = vld [vmem:[%s3] sm:$0x1]
        %v1021 = vlaneseq
        %v1022 = vshrl.u32 %v1021, 7
        %v1023 = vsub.s32 0, %v1022
        %v1024 = vrot.slane %v1019, %v1023
        %v1026 = vadd.f32 %v1015, %v1024
        %v1027 = vadd.f32 %v1016, %v1024
        %v1028 = vadd.f32 %v1017, %v1024
        %v1029 = vadd.f32 %v1018, %v1024
        %v1030 = vmul.f32 %v1026, 0.5
        %v1031 = vmul.f32 %v1027, 0.5
        %v1032 = vmul.f32 %v1028, 0.5
        %v1033 = vmul.f32 %v1029, 0.5
        %v1034 = vmul.f32 %v1026, 0.70710677
        %v1035 = vmul.f32 %v1027, 0.70710677
        %v1036 = vmul.f32 %v1028, 0.70710677
        %v1037 = vmul.f32 %v1029, 0.70710677
        %v1038 = vand.u32 2147483647, %v1034
        %v1039 = vand.u32 2147483647, %v1035
        %v1040 = vand.u32 2147483647, %v1036
        %v1041 = vand.u32 2147483647, %v1037
        %v1042 = vmul.f32 %v1038, 0.3275911
        %v1043 = vmul.f32 %v1039, 0.3275911
        %v1044 = vmul.f32 %v1040, 0.3275911
        %v1045 = vmul.f32 %v1041, 0.3275911
        %v1046 = vadd.f32 %v1042, 1.0
        %v1047 = vadd.f32 %v1043, 1.0
        %v1048 = vadd.f32 %v1044, 1.0
        %v1049 = vadd.f32 %v1045, 1.0
        %v1050 = vrcp.pop %v1046
        %v1051 = vrcp.pop %v1047
        %v1052 = vrcp.pop %v1048
        %v1053 = vrcp.pop %v1049
        %v1054 = vmul.f32 %v1046, %v1050
        %v1055 = vmul.f32 %v1047, %v1051
        %v1056 = vmul.f32 %v1048, %v1052
        %v1057 = vmul.f32 %v1049, %v1053
        %v1058 = vsub.f32 2.0, %v1054
        %v1059 = vsub.f32 2.0, %v1055
        %v1060 = vsub.f32 2.0, %v1056
        %v1061 = vsub.f32 2.0, %v1057
        %v1062 = vmul.f32 %v1050, %v1058
        %v1063 = vmul.f32 %v1051, %v1059
        %v1064 = vmul.f32 %v1052, %v1060
        %v1065 = vmul.f32 %v1053, %v1061
        %v1066 = vmul.f32 %v1062, 1.0614054
        %v1067 = vmul.f32 %v1063, 1.0614054
        %v1068 = vmul.f32 %v1064, 1.0614054
        %v1069 = vmul.f32 %v1065, 1.0614054
        %v1070 = vadd.f32 %v1066, -1.4531521
        %v1071 = vadd.f32 %v1067, -1.4531521
        %v1072 = vadd.f32 %v1068, -1.4531521
        %v1073 = vadd.f32 %v1069, -1.4531521
        %v1074 = vmul.f32 %v1070, %v1062
        %v1075 = vmul.f32 %v1071, %v1063
        %v1076 = vmul.f32 %v1072, %v1064
        %v1077 = vmul.f32 %v1073, %v1065
        %v1078 = vadd.f32 %v1074, 1.4214138
        %v1079 = vadd.f32 %v1075, 1.4214138
        %v1080 = vadd.f32 %v1076, 1.4214138
        %v1081 = vadd.f32 %v1077, 1.4214138
        %v1082 = vmul.f32 %v1078, %v1062
        %v1083 = vmul.f32 %v1079, %v1063
        %v1084 = vmul.f32 %v1080, %v1064
        %v1085 = vmul.f32 %v1081, %v1065
        %v1086 = vadd.f32 %v1082, -0.28449672
        %v1087 = vadd.f32 %v1083, -0.28449672
        %v1088 = vadd.f32 %v1084, -0.28449672
        %v1089 = vadd.f32 %v1085, -0.28449672
        %v1090 = vmul.f32 %v1086, %v1062
        %v1091 = vmul.f32 %v1087, %v1063
        %v1092 = vmul.f32 %v1088, %v1064
        %v1093 = vmul.f32 %v1089, %v1065
        %v1094 = vadd.f32 %v1090, 0.2548296
        %v1095 = vadd.f32 %v1091, 0.2548296
        %v1096 = vadd.f32 %v1092, 0.2548296
        %v1097 = vadd.f32 %v1093, 0.2548296
        %v1098 = vmul.f32 %v1094, %v1062
        %v1099 = vmul.f32 %v1095, %v1063
        %v1100 = vmul.f32 %v1096, %v1064
        %v1101 = vmul.f32 %v1097, %v1065
        %v1102 = vsub.f32 0.0, %v1038
        %v1103 = vsub.f32 0.0, %v1039
        %v1104 = vsub.f32 0.0, %v1040
        %v1105 = vsub.f32 0.0, %v1041
        %v1106 = vmul.f32 %v1102, %v1038
        %v1107 = vmul.f32 %v1103, %v1039
        %v1108 = vmul.f32 %v1104, %v1040
        %v1109 = vmul.f32 %v1105, %v1041
        %v1110 = vmul.f32 %v1106, 1.442695
        %v1111 = vpow.pop %v1110
        %v1112 = vmul.f32 %v1107, 1.442695
        %v1113 = vpow.pop %v1112
        %v1114 = vmul.f32 %v1108, 1.442695
        %v1115 = vpow.pop %v1114
        %v1116 = vmul.f32 %v1109, 1.442695
        %v1117 = vpow.pop %v1116
        %v1118 = vmul.f32 %v1098, %v1111
        %v1119 = vmul.f32 %v1099, %v1113
        %v1120 = vmul.f32 %v1100, %v1115
        %v1121 = vmul.f32 %v1101, %v1117
        %v1122 = vsub.f32 1.0, %v1118
        %v1123 = vsub.f32 1.0, %v1119
        %v1124 = vsub.f32 1.0, %v1120
        %v1125 = vsub.f32 1.0, %v1121
        %vm1126 = vcmp.lt.f32.partialorder %v1034, 0.0
        %vm1127 = vcmp.lt.f32.partialorder %v1035, 0.0
        %vm1128 = vcmp.lt.f32.partialorder %v1036, 0.0
        %vm1129 = vcmp.lt.f32.partialorder %v1037, 0.0
        %v1130 = vsub.f32 0.0, %v1122
        %v1131 = vsub.f32 0.0, %v1123
        %v1132 = vsub.f32 0.0, %v1124
        %v1133 = vsub.f32 0.0, %v1125
        %v1134 = vsel %vm1126, %v1130, %v1122
        %v1135 = vsel %vm1127, %v1131, %v1123
        %v1136 = vsel %vm1128, %v1132, %v1124
        %v1137 = vsel %vm1129, %v1133, %v1125
        %v1138 = vadd.f32 %v1134, 1.0
        %v1139 = vadd.f32 %v1135, 1.0
        %v1140 = vadd.f32 %v1136, 1.0
        %v1141 = vadd.f32 %v1137, 1.0
        %v1142 = vmul.f32 %v1030, %v1138
        %v1143 = vmul.f32 %v1031, %v1139
        %v1144 = vmul.f32 %v1032, %v1140
        %v1145 = vmul.f32 %v1033, %v1141
        %v1146 = vld [vmem:[%s4] sm:$0xff]
        %v1147 = vld [vmem:[%s4 + $0x8] sm:$0xff]
        %v1148 = vld [vmem:[%s4 + $0x10] sm:$0xff]
        %v1149 = vld [vmem:[%s4 + $0x18] sm:$0xff]
        %v1150 = vld [vmem:[%s4 + $0x20] sm:$0xff]
        %v1151 = vld [vmem:[%s4 + $0x28] sm:$0xff]
        %v1152 = vld [vmem:[%s4 + $0x30] sm:$0xff]
        %v1153 = vld [vmem:[%s4 + $0x38] sm:$0xff]
        %vm1154 = vcmask 261120
        %v1156 = vsel %vm1154, %v1146, 0
        %v1159 = vsel %vm1154, %v1147, 0
        %v1162 = vsel %vm1154, %v1148, 0
        %v1165 = vsel %vm1154, %v1149, 0
        %v1168 = vsel %vm1154, %v1150, 0
        %v1171 = vsel %vm1154, %v1151, 0
        %v1174 = vsel %vm1154, %v1152, 0
        %v1177 = vsel %vm1154, %v1153, 0
        %1179 = vmatprep.subr.mxu0 0.0
        %1180 = vmatpush1.msra.mxu0 %v1142
        %1181 = vmatprep.subr.mxu0 0.0
        %1182 = vmatpush1.msra.mxu0 %v1143
        %1183 = vmatprep.subr.mxu0 0.0
        %1184 = vmatpush1.msra.mxu0 %v1144
        %1185 = vmatprep.subr.mxu0 0.0
        %1186 = vmatpush1.msra.mxu0 %v1145
        %1187 = vmatprep.subr.mxu0 0.0
        %1188 = vmatpush1.msra.mxu0 0.0
        %1189 = vmatprep.subr.mxu0 0.0
        %1190 = vmatpush1.msra.mxu0 0.0
        %1191 = vmatprep.subr.mxu0 0.0
        %1192 = vmatpush1.msra.mxu0 0.0
        %1193 = vmatprep.subr.mxu0 0.0
        %1194 = vmatpush1.msra.mxu0 0.0
        %1195 = vmatprep.subr.mxu0 0.0
        %1196 = vmatpush1.msra.mxu0 0.0
        %1197 = vmatprep.subr.mxu0 0.0
        %1198 = vmatpush1.msra.mxu0 0.0
        %1199 = vmatprep.subr.mxu0 0.0
        %1200 = vmatpush1.msra.mxu0 0.0
        %1201 = vmatprep.subr.mxu0 0.0
        %1202 = vmatpush1.msra.mxu0 0.0
        %1203 = vmatprep.subr.mxu0 0.0
        %1204 = vmatpush1.msra.mxu0 0.0
        %1205 = vmatprep.subr.mxu0 0.0
        %1206 = vmatpush1.msra.mxu0 0.0
        %1207 = vmatprep.subr.mxu0 0.0
        %1208 = vmatpush1.msra.mxu0 0.0
        %1209 = vmatprep.subr.mxu0 0.0
        %1210 = vmatpush1.msra.mxu0 0.0
        %1211 = vmatprep.subr.mxu0 0.0
        %1212 = vmatpush1.msra.mxu0 0.0
        %1213 = vmatprep.subr.mxu0 0.0
        %1214 = vmatpush1.msra.mxu0 0.0
        %1215 = vmatprep.subr.mxu0 0.0
        %1216 = vmatpush1.msra.mxu0 0.0
        %1217 = vmatprep.subr.mxu0 0.0
        %1218 = vmatpush1.msra.mxu0 0.0
        %1219 = vmatprep.subr.mxu0 0.0
        %1220 = vmatpush1.msra.mxu0 0.0
        %1221 = vmatprep.subr.mxu0 0.0
        %1222 = vmatpush1.msra.mxu0 0.0
        %1223 = vmatprep.subr.mxu0 0.0
        %1224 = vmatpush1.msra.mxu0 0.0
        %1225 = vmatprep.subr.mxu0 0.0
        %1226 = vmatpush1.msra.mxu0 0.0
        %1227 = vmatprep.subr.mxu0 0.0
        %1228 = vmatpush1.msra.mxu0 0.0
        %1229 = vmatprep.subr.mxu0 0.0
        %1230 = vmatpush1.msra.mxu0 0.0
        %1231 = vmatprep.subr.mxu0 0.0
        %1232 = vmatpush1.msra.mxu0 0.0
        %1233 = vmatprep.subr.mxu0 0.0
        %1234 = vmatpush1.msra.mxu0 0.0
        %1235 = vmatprep.subr.mxu0 0.0
        %1236 = vmatpush1.msra.mxu0 0.0
        %1237 = vmatprep.subr.mxu0 0.0
        %1238 = vmatpush1.msra.mxu0 0.0
        %1239 = vmatprep.subr.mxu0 0.0
        %1240 = vmatpush1.msra.mxu0 0.0
        %1241 = vmatprep.subr.mxu0 0.0
        %1242 = vmatpush1.msra.mxu0 0.0
        %1243 = vmatprep.mubr.f32.mxu0 0.0
        %1244 = vmatmul.mubr.f32.gmra.mrb[0].mxu0 %v1156
        %v1245 = vpop.f32.mrb[0].mxu0
        %v1246 = vadd.f32 0.0, %v1245
        %v1247 = vpop.f32.mrb[0].mxu0
        %1248 = vmatprep.mubr.f32.mxu0 0.0
        %1249 = vmatmul.mubr.f32.gmra.mrb[0].mxu0 %v1159
        %v1250 = vpop.f32.mrb[0].mxu0
        %v1251 = vadd.f32 0.0, %v1250
        %v1252 = vpop.f32.mrb[0].mxu0
        %1253 = vmatprep.mubr.f32.mxu0 0.0
        %1254 = vmatmul.mubr.f32.gmra.mrb[0].mxu0 %v1162
        %v1255 = vpop.f32.mrb[0].mxu0
        %v1256 = vadd.f32 0.0, %v1255
        %v1257 = vpop.f32.mrb[0].mxu0
        %1258 = vmatprep.mubr.f32.mxu0 0.0
        %1259 = vmatmul.mubr.f32.gmra.mrb[0].mxu0 %v1165
        %v1260 = vpop.f32.mrb[0].mxu0
        %v1261 = vadd.f32 0.0, %v1260
        %v1262 = vpop.f32.mrb[0].mxu0
        %1263 = vmatprep.mubr.f32.mxu0 0.0
        %1264 = vmatmul.mubr.f32.gmra.mrb[0].mxu0 %v1168
        %v1265 = vpop.f32.mrb[0].mxu0
        %v1266 = vadd.f32 0.0, %v1265
        %v1267 = vpop.f32.mrb[0].mxu0
        %1268 = vmatprep.mubr.f32.mxu0 0.0
        %1269 = vmatmul.mubr.f32.gmra.mrb[0].mxu0 %v1171
        %v1270 = vpop.f32.mrb[0].mxu0
        %v1271 = vadd.f32 0.0, %v1270
        %v1272 = vpop.f32.mrb[0].mxu0
        %1273 = vmatprep.mubr.f32.mxu0 0.0
        %1274 = vmatmul.mubr.f32.gmra.mrb[0].mxu0 %v1174
        %v1275 = vpop.f32.mrb[0].mxu0
        %v1276 = vadd.f32 0.0, %v1275
        %v1277 = vpop.f32.mrb[0].mxu0
        %1278 = vmatprep.mubr.f32.mxu0 0.0
        %1279 = vmatmul.mubr.f32.gmra.mrb[0].mxu0 %v1177
        %v1280 = vpop.f32.mrb[0].mxu0
        %v1281 = vadd.f32 0.0, %v1280
        %v1282 = vpop.f32.mrb[0].mxu0
        %1283 = vdwg.mxu0
        %v1284 = vld [vmem:[%s5] sm:$0xff]
        %v1285 = vld [vmem:[%s5 + $0x8] sm:$0xff]
        %v1286 = vld [vmem:[%s5 + $0x10] sm:$0xff]
        %v1287 = vld [vmem:[%s5 + $0x18] sm:$0xff]
        %v1288 = vld [vmem:[%s5 + $0x20] sm:$0xff]
        %v1289 = vld [vmem:[%s5 + $0x28] sm:$0xff]
        %v1290 = vld [vmem:[%s5 + $0x30] sm:$0xff]
        %v1291 = vld [vmem:[%s5 + $0x38] sm:$0xff]
        %s1292 = scalar_lea.vmem %s5, 64
        %v1293 = vld [vmem:[%s1292] sm:$0xff]
        %v1294 = vld [vmem:[%s1292 + $0x8] sm:$0xff]
        %v1295 = vld [vmem:[%s1292 + $0x10] sm:$0xff]
        %v1296 = vld [vmem:[%s1292 + $0x18] sm:$0xff]
        %v1297 = vld [vmem:[%s1292 + $0x20] sm:$0xff]
        %v1298 = vld [vmem:[%s1292 + $0x28] sm:$0xff]
        %v1299 = vld [vmem:[%s1292 + $0x30] sm:$0xff]
        %v1300 = vld [vmem:[%s1292 + $0x38] sm:$0xff]
        %v1302 = vsel %vm408, %v1256, 0
        %v1305 = vsel %vm408, %v1261, 0
        %1307 = vmatprep.subr.mxu0 0.0
        %1308 = vmatpush1.msra.mxu0 %v1293
        %1309 = vmatprep.subr.mxu0 0.0
        %1310 = vmatpush1.msra.mxu0 %v1294
        %1311 = vmatprep.subr.mxu0 0.0
        %1312 = vmatpush1.msra.mxu0 %v1295
        %1313 = vmatprep.subr.mxu0 0.0
        %1314 = vmatpush1.msra.mxu0 %v1296
        %1315 = vmatprep.subr.mxu0 0.0
        %1316 = vmatpush1.msra.mxu0 %v1297
        %1317 = vmatprep.subr.mxu0 0.0
        %1318 = vmatpush1.msra.mxu0 %v1298
        %1319 = vmatprep.subr.mxu0 0.0
        %1320 = vmatpush1.msra.mxu0 %v1299
        %1321 = vmatprep.subr.mxu0 0.0
        %1322 = vmatpush1.msra.mxu0 %v1300
        %1323 = vmatprep.subr.mxu0 0.0
        %1324 = vmatpush1.msra.mxu0 0.0
        %1325 = vmatprep.subr.mxu0 0.0
        %1326 = vmatpush1.msra.mxu0 0.0
        %1327 = vmatprep.subr.mxu0 0.0
        %1328 = vmatpush1.msra.mxu0 0.0
        %1329 = vmatprep.subr.mxu0 0.0
        %1330 = vmatpush1.msra.mxu0 0.0
        %1331 = vmatprep.subr.mxu0 0.0
        %1332 = vmatpush1.msra.mxu0 0.0
        %1333 = vmatprep.subr.mxu0 0.0
        %1334 = vmatpush1.msra.mxu0 0.0
        %1335 = vmatprep.subr.mxu0 0.0
        %1336 = vmatpush1.msra.mxu0 0.0
        %1337 = vmatprep.subr.mxu0 0.0
        %1338 = vmatpush1.msra.mxu0 0.0
        %1339 = vmatprep.subr.mxu0 0.0
        %1340 = vmatpush1.msra.mxu0 0.0
        %1341 = vmatprep.subr.mxu0 0.0
        %1342 = vmatpush1.msra.mxu0 0.0
        %1343 = vmatprep.subr.mxu0 0.0
        %1344 = vmatpush1.msra.mxu0 0.0
        %1345 = vmatprep.subr.mxu0 0.0
        %1346 = vmatpush1.msra.mxu0 0.0
        %1347 = vmatprep.subr.mxu0 0.0
        %1348 = vmatpush1.msra.mxu0 0.0
        %1349 = vmatprep.subr.mxu0 0.0
        %1350 = vmatpush1.msra.mxu0 0.0
        %1351 = vmatprep.subr.mxu0 0.0
        %1352 = vmatpush1.msra.mxu0 0.0
        %1353 = vmatprep.subr.mxu0 0.0
        %1354 = vmatpush1.msra.mxu0 0.0
        %1355 = vmatprep.subr.mxu0 0.0
        %1356 = vmatpush1.msra.mxu0 0.0
        %1357 = vmatprep.subr.mxu0 0.0
        %1358 = vmatpush1.msra.mxu0 0.0
        %1359 = vmatprep.subr.mxu0 0.0
        %1360 = vmatpush1.msra.mxu0 0.0
        %1361 = vmatprep.subr.mxu0 0.0
        %1362 = vmatpush1.msra.mxu0 0.0
        %1363 = vmatprep.subr.mxu0 0.0
        %1364 = vmatpush1.msra.mxu0 0.0
        %1365 = vmatprep.subr.mxu0 0.0
        %1366 = vmatpush1.msra.mxu0 0.0
        %1367 = vmatprep.subr.mxu0 0.0
        %1368 = vmatpush1.msra.mxu0 0.0
        %1369 = vmatprep.subr.mxu0 0.0
        %1370 = vmatpush1.msra.mxu0 0.0
        %1371 = vmatprep.mubr.f32.mxu0 0.0
        %1372 = vmatmul.mubr.f32.gmra.mrb[0].mxu0 %v1302
        %v1373 = vpop.f32.mrb[0].mxu0
        %v1374 = vadd.f32 0.0, %v1373
        %v1375 = vpop.f32.mrb[0].mxu0
        %1376 = vmatprep.mubr.f32.mxu0 0.0
        %1377 = vmatmul.mubr.f32.gmra.mrb[0].mxu0 %v1305
        %v1378 = vpop.f32.mrb[0].mxu0
        %v1379 = vadd.f32 0.0, %v1378
        %v1380 = vpop.f32.mrb[0].mxu0
        %1381 = vdwg.mxu0
        %v1383 = vsel %vm408, %v1246, 0
        %v1386 = vsel %vm408, %v1251, 0
        %1388 = vmatprep.subr.mxu0 0.0
        %1389 = vmatpush1.msra.mxu0 %v1284
        %1390 = vmatprep.subr.mxu0 0.0
        %1391 = vmatpush1.msra.mxu0 %v1285
        %1392 = vmatprep.subr.mxu0 0.0
        %1393 = vmatpush1.msra.mxu0 %v1286
        %1394 = vmatprep.subr.mxu0 0.0
        %1395 = vmatpush1.msra.mxu0 %v1287
        %1396 = vmatprep.subr.mxu0 0.0
        %1397 = vmatpush1.msra.mxu0 %v1288
        %1398 = vmatprep.subr.mxu0 0.0
        %1399 = vmatpush1.msra.mxu0 %v1289
        %1400 = vmatprep.subr.mxu0 0.0
        %1401 = vmatpush1.msra.mxu0 %v1290
        %1402 = vmatprep.subr.mxu0 0.0
        %1403 = vmatpush1.msra.mxu0 %v1291
        %1404 = vmatprep.subr.mxu0 0.0
        %1405 = vmatpush1.msra.mxu0 0.0
        %1406 = vmatprep.subr.mxu0 0.0
        %1407 = vmatpush1.msra.mxu0 0.0
        %1408 = vmatprep.subr.mxu0 0.0
        %1409 = vmatpush1.msra.mxu0 0.0
        %1410 = vmatprep.subr.mxu0 0.0
        %1411 = vmatpush1.msra.mxu0 0.0
        %1412 = vmatprep.subr.mxu0 0.0
        %1413 = vmatpush1.msra.mxu0 0.0
        %1414 = vmatprep.subr.mxu0 0.0
        %1415 = vmatpush1.msra.mxu0 0.0
        %1416 = vmatprep.subr.mxu0 0.0
        %1417 = vmatpush1.msra.mxu0 0.0
        %1418 = vmatprep.subr.mxu0 0.0
        %1419 = vmatpush1.msra.mxu0 0.0
        %1420 = vmatprep.subr.mxu0 0.0
        %1421 = vmatpush1.msra.mxu0 0.0
        %1422 = vmatprep.subr.mxu0 0.0
        %1423 = vmatpush1.msra.mxu0 0.0
        %1424 = vmatprep.subr.mxu0 0.0
        %1425 = vmatpush1.msra.mxu0 0.0
        %1426 = vmatprep.subr.mxu0 0.0
        %1427 = vmatpush1.msra.mxu0 0.0
        %1428 = vmatprep.subr.mxu0 0.0
        %1429 = vmatpush1.msra.mxu0 0.0
        %1430 = vmatprep.subr.mxu0 0.0
        %1431 = vmatpush1.msra.mxu0 0.0
        %1432 = vmatprep.subr.mxu0 0.0
        %1433 = vmatpush1.msra.mxu0 0.0
        %1434 = vmatprep.subr.mxu0 0.0
        %1435 = vmatpush1.msra.mxu0 0.0
        %1436 = vmatprep.subr.mxu0 0.0
        %1437 = vmatpush1.msra.mxu0 0.0
        %1438 = vmatprep.subr.mxu0 0.0
        %1439 = vmatpush1.msra.mxu0 0.0
        %1440 = vmatprep.subr.mxu0 0.0
        %1441 = vmatpush1.msra.mxu0 0.0
        %1442 = vmatprep.subr.mxu0 0.0
        %1443 = vmatpush1.msra.mxu0 0.0
        %1444 = vmatprep.subr.mxu0 0.0
        %1445 = vmatpush1.msra.mxu0 0.0
        %1446 = vmatprep.subr.mxu0 0.0
        %1447 = vmatpush1.msra.mxu0 0.0
        %1448 = vmatprep.subr.mxu0 0.0
        %1449 = vmatpush1.msra.mxu0 0.0
        %1450 = vmatprep.subr.mxu0 0.0
        %1451 = vmatpush1.msra.mxu0 0.0
        %1452 = vmatprep.mubr.f32.mxu0 0.0
        %1453 = vmatmul.mubr.f32.gmra.mrb[0].mxu0 %v1383
        %v1454 = vpop.f32.mrb[0].mxu0
        %v1455 = vadd.f32 %v1374, %v1454
        %v1456 = vpop.f32.mrb[0].mxu0
        %1457 = vmatprep.mubr.f32.mxu0 0.0
        %1458 = vmatmul.mubr.f32.gmra.mrb[0].mxu0 %v1386
        %v1459 = vpop.f32.mrb[0].mxu0
        %v1460 = vadd.f32 %v1379, %v1459
        %v1461 = vpop.f32.mrb[0].mxu0
        %1462 = vdwg.mxu0
        %s1463 = scalar_lea.vmem %s5, 128
        %v1464 = vld [vmem:[%s1463] sm:$0xff]
        %v1465 = vld [vmem:[%s1463 + $0x8] sm:$0xff]
        %v1466 = vld [vmem:[%s1463 + $0x10] sm:$0xff]
        %v1467 = vld [vmem:[%s1463 + $0x18] sm:$0xff]
        %v1468 = vld [vmem:[%s1463 + $0x20] sm:$0xff]
        %v1469 = vld [vmem:[%s1463 + $0x28] sm:$0xff]
        %v1470 = vld [vmem:[%s1463 + $0x30] sm:$0xff]
        %v1471 = vld [vmem:[%s1463 + $0x38] sm:$0xff]
        %v1473 = vsel %vm408, %v1266, 0
        %v1476 = vsel %vm408, %v1271, 0
        %1478 = vmatprep.subr.mxu0 0.0
        %1479 = vmatpush1.msra.mxu0 %v1464
        %1480 = vmatprep.subr.mxu0 0.0
        %1481 = vmatpush1.msra.mxu0 %v1465
        %1482 = vmatprep.subr.mxu0 0.0
        %1483 = vmatpush1.msra.mxu0 %v1466
        %1484 = vmatprep.subr.mxu0 0.0
        %1485 = vmatpush1.msra.mxu0 %v1467
        %1486 = vmatprep.subr.mxu0 0.0
        %1487 = vmatpush1.msra.mxu0 %v1468
        %1488 = vmatprep.subr.mxu0 0.0
        %1489 = vmatpush1.msra.mxu0 %v1469
        %1490 = vmatprep.subr.mxu0 0.0
        %1491 = vmatpush1.msra.mxu0 %v1470
        %1492 = vmatprep.subr.mxu0 0.0
        %1493 = vmatpush1.msra.mxu0 %v1471
        %1494 = vmatprep.subr.mxu0 0.0
        %1495 = vmatpush1.msra.mxu0 0.0
        %1496 = vmatprep.subr.mxu0 0.0
        %1497 = vmatpush1.msra.mxu0 0.0
        %1498 = vmatprep.subr.mxu0 0.0
        %1499 = vmatpush1.msra.mxu0 0.0
        %1500 = vmatprep.subr.mxu0 0.0
        %1501 = vmatpush1.msra.mxu0 0.0
        %1502 = vmatprep.subr.mxu0 0.0
        %1503 = vmatpush1.msra.mxu0 0.0
        %1504 = vmatprep.subr.mxu0 0.0
        %1505 = vmatpush1.msra.mxu0 0.0
        %1506 = vmatprep.subr.mxu0 0.0
        %1507 = vmatpush1.msra.mxu0 0.0
        %1508 = vmatprep.subr.mxu0 0.0
        %1509 = vmatpush1.msra.mxu0 0.0
        %1510 = vmatprep.subr.mxu0 0.0
        %1511 = vmatpush1.msra.mxu0 0.0
        %1512 = vmatprep.subr.mxu0 0.0
        %1513 = vmatpush1.msra.mxu0 0.0
        %1514 = vmatprep.subr.mxu0 0.0
        %1515 = vmatpush1.msra.mxu0 0.0
        %1516 = vmatprep.subr.mxu0 0.0
        %1517 = vmatpush1.msra.mxu0 0.0
        %1518 = vmatprep.subr.mxu0 0.0
        %1519 = vmatpush1.msra.mxu0 0.0
        %1520 = vmatprep.subr.mxu0 0.0
        %1521 = vmatpush1.msra.mxu0 0.0
        %1522 = vmatprep.subr.mxu0 0.0
        %1523 = vmatpush1.msra.mxu0 0.0
        %1524 = vmatprep.subr.mxu0 0.0
        %1525 = vmatpush1.msra.mxu0 0.0
        %1526 = vmatprep.subr.mxu0 0.0
        %1527 = vmatpush1.msra.mxu0 0.0
        %1528 = vmatprep.subr.mxu0 0.0
        %1529 = vmatpush1.msra.mxu0 0.0
        %1530 = vmatprep.subr.mxu0 0.0
        %1531 = vmatpush1.msra.mxu0 0.0
        %1532 = vmatprep.subr.mxu0 0.0
        %1533 = vmatpush1.msra.mxu0 0.0
        %1534 = vmatprep.subr.mxu0 0.0
        %1535 = vmatpush1.msra.mxu0 0.0
        %1536 = vmatprep.subr.mxu0 0.0
        %1537 = vmatpush1.msra.mxu0 0.0
        %1538 = vmatprep.subr.mxu0 0.0
        %1539 = vmatpush1.msra.mxu0 0.0
        %1540 = vmatprep.subr.mxu0 0.0
        %1541 = vmatpush1.msra.mxu0 0.0
        %1542 = vmatprep.mubr.f32.mxu0 0.0
        %1543 = vmatmul.mubr.f32.gmra.mrb[0].mxu0 %v1473
        %v1544 = vpop.f32.mrb[0].mxu0
        %v1545 = vadd.f32 0.0, %v1544
        %v1546 = vpop.f32.mrb[0].mxu0
        %1547 = vmatprep.mubr.f32.mxu0 0.0
        %1548 = vmatmul.mubr.f32.gmra.mrb[0].mxu0 %v1476
        %v1549 = vpop.f32.mrb[0].mxu0
        %v1550 = vadd.f32 0.0, %v1549
        %v1551 = vpop.f32.mrb[0].mxu0
        %1552 = vdwg.mxu0
        %v1553 = vadd.f32 %v1455, %v1545
        %v1554 = vadd.f32 %v1460, %v1550
        %s1555 = scalar_lea.vmem %s5, 192
        %v1556 = vld [vmem:[%s1555] sm:$0xff]
        %v1557 = vld [vmem:[%s1555 + $0x8] sm:$0xff]
        %v1558 = vld [vmem:[%s1555 + $0x10] sm:$0xff]
        %v1559 = vld [vmem:[%s1555 + $0x18] sm:$0xff]
        %v1560 = vld [vmem:[%s1555 + $0x20] sm:$0xff]
        %v1561 = vld [vmem:[%s1555 + $0x28] sm:$0xff]
        %v1562 = vld [vmem:[%s1555 + $0x30] sm:$0xff]
        %v1563 = vld [vmem:[%s1555 + $0x38] sm:$0xff]
        %v1565 = vsel %vm408, %v1276, 0
        %v1568 = vsel %vm408, %v1281, 0
        %1570 = vmatprep.subr.mxu0 0.0
        %1571 = vmatpush1.msra.mxu0 %v1556
        %1572 = vmatprep.subr.mxu0 0.0
        %1573 = vmatpush1.msra.mxu0 %v1557
        %1574 = vmatprep.subr.mxu0 0.0
        %1575 = vmatpush1.msra.mxu0 %v1558
        %1576 = vmatprep.subr.mxu0 0.0
        %1577 = vmatpush1.msra.mxu0 %v1559
        %1578 = vmatprep.subr.mxu0 0.0
        %1579 = vmatpush1.msra.mxu0 %v1560
        %1580 = vmatprep.subr.mxu0 0.0
        %1581 = vmatpush1.msra.mxu0 %v1561
        %1582 = vmatprep.subr.mxu0 0.0
        %1583 = vmatpush1.msra.mxu0 %v1562
        %1584 = vmatprep.subr.mxu0 0.0
        %1585 = vmatpush1.msra.mxu0 %v1563
        %1586 = vmatprep.subr.mxu0 0.0
        %1587 = vmatpush1.msra.mxu0 0.0
        %1588 = vmatprep.subr.mxu0 0.0
        %1589 = vmatpush1.msra.mxu0 0.0
        %1590 = vmatprep.subr.mxu0 0.0
        %1591 = vmatpush1.msra.mxu0 0.0
        %1592 = vmatprep.subr.mxu0 0.0
        %1593 = vmatpush1.msra.mxu0 0.0
        %1594 = vmatprep.subr.mxu0 0.0
        %1595 = vmatpush1.msra.mxu0 0.0
        %1596 = vmatprep.subr.mxu0 0.0
        %1597 = vmatpush1.msra.mxu0 0.0
        %1598 = vmatprep.subr.mxu0 0.0
        %1599 = vmatpush1.msra.mxu0 0.0
        %1600 = vmatprep.subr.mxu0 0.0
        %1601 = vmatpush1.msra.mxu0 0.0
        %1602 = vmatprep.subr.mxu0 0.0
        %1603 = vmatpush1.msra.mxu0 0.0
        %1604 = vmatprep.subr.mxu0 0.0
        %1605 = vmatpush1.msra.mxu0 0.0
        %1606 = vmatprep.subr.mxu0 0.0
        %1607 = vmatpush1.msra.mxu0 0.0
        %1608 = vmatprep.subr.mxu0 0.0
        %1609 = vmatpush1.msra.mxu0 0.0
        %1610 = vmatprep.subr.mxu0 0.0
        %1611 = vmatpush1.msra.mxu0 0.0
        %1612 = vmatprep.subr.mxu0 0.0
        %1613 = vmatpush1.msra.mxu0 0.0
        %1614 = vmatprep.subr.mxu0 0.0
        %1615 = vmatpush1.msra.mxu0 0.0
        %1616 = vmatprep.subr.mxu0 0.0
        %1617 = vmatpush1.msra.mxu0 0.0
        %1618 = vmatprep.subr.mxu0 0.0
        %1619 = vmatpush1.msra.mxu0 0.0
        %1620 = vmatprep.subr.mxu0 0.0
        %1621 = vmatpush1.msra.mxu0 0.0
        %1622 = vmatprep.subr.mxu0 0.0
        %1623 = vmatpush1.msra.mxu0 0.0
        %1624 = vmatprep.subr.mxu0 0.0
        %1625 = vmatpush1.msra.mxu0 0.0
        %1626 = vmatprep.subr.mxu0 0.0
        %1627 = vmatpush1.msra.mxu0 0.0
        %1628 = vmatprep.subr.mxu0 0.0
        %1629 = vmatpush1.msra.mxu0 0.0
        %1630 = vmatprep.subr.mxu0 0.0
        %1631 = vmatpush1.msra.mxu0 0.0
        %1632 = vmatprep.subr.mxu0 0.0
        %1633 = vmatpush1.msra.mxu0 0.0
        %1634 = vmatprep.mubr.f32.mxu0 0.0
        %1635 = vmatmul.mubr.f32.gmra.mrb[0].mxu0 %v1565
        %v1636 = vpop.f32.mrb[0].mxu0
        %v1637 = vadd.f32 0.0, %v1636
        %v1638 = vpop.f32.mrb[0].mxu0
        %1639 = vmatprep.mubr.f32.mxu0 0.0
        %1640 = vmatmul.mubr.f32.gmra.mrb[0].mxu0 %v1568
        %v1641 = vpop.f32.mrb[0].mxu0
        %v1642 = vadd.f32 0.0, %v1641
        %v1643 = vpop.f32.mrb[0].mxu0
        %1644 = vdwg.mxu0
        %v1645 = vadd.f32 %v1553, %v1637
        %v1646 = vadd.f32 %v1554, %v1642
        %v1647 = vld [vmem:[%s6] sm:$0x1]
        %v1649 = vlaneseq
        %v1650 = vshrl.u32 %v1649, 7
        %v1651 = vsub.s32 0, %v1650
        %v1652 = vrot.slane %v1647, %v1651
        %v1654 = vadd.f32 %v1645, %v1652
        %v1655 = vadd.f32 %v1646, %v1652
        %v1656 = vmul.f32 %v1654, 0.5
        %v1657 = vmul.f32 %v1655, 0.5
        %v1658 = vmul.f32 %v1654, 0.70710677
        %v1659 = vmul.f32 %v1655, 0.70710677
        %v1660 = vand.u32 2147483647, %v1658
        %v1661 = vand.u32 2147483647, %v1659
        %v1662 = vmul.f32 %v1660, 0.3275911
        %v1663 = vmul.f32 %v1661, 0.3275911
        %v1664 = vadd.f32 %v1662, 1.0
        %v1665 = vadd.f32 %v1663, 1.0
        %v1666 = vrcp.pop %v1664
        %v1667 = vrcp.pop %v1665
        %v1668 = vmul.f32 %v1664, %v1666
        %v1669 = vmul.f32 %v1665, %v1667
        %v1670 = vsub.f32 2.0, %v1668
        %v1671 = vsub.f32 2.0, %v1669
        %v1672 = vmul.f32 %v1666, %v1670
        %v1673 = vmul.f32 %v1667, %v1671
        %v1674 = vmul.f32 %v1672, 1.0614054
        %v1675 = vmul.f32 %v1673, 1.0614054
        %v1676 = vadd.f32 %v1674, -1.4531521
        %v1677 = vadd.f32 %v1675, -1.4531521
        %v1678 = vmul.f32 %v1676, %v1672
        %v1679 = vmul.f32 %v1677, %v1673
        %v1680 = vadd.f32 %v1678, 1.4214138
        %v1681 = vadd.f32 %v1679, 1.4214138
        %v1682 = vmul.f32 %v1680, %v1672
        %v1683 = vmul.f32 %v1681, %v1673
        %v1684 = vadd.f32 %v1682, -0.28449672
        %v1685 = vadd.f32 %v1683, -0.28449672
        %v1686 = vmul.f32 %v1684, %v1672
        %v1687 = vmul.f32 %v1685, %v1673
        %v1688 = vadd.f32 %v1686, 0.2548296
        %v1689 = vadd.f32 %v1687, 0.2548296
        %v1690 = vmul.f32 %v1688, %v1672
        %v1691 = vmul.f32 %v1689, %v1673
        %v1692 = vsub.f32 0.0, %v1660
        %v1693 = vsub.f32 0.0, %v1661
        %v1694 = vmul.f32 %v1692, %v1660
        %v1695 = vmul.f32 %v1693, %v1661
        %v1696 = vmul.f32 %v1694, 1.442695
        %v1697 = vpow.pop %v1696
        %v1698 = vmul.f32 %v1695, 1.442695
        %v1699 = vpow.pop %v1698
        %v1700 = vmul.f32 %v1690, %v1697
        %v1701 = vmul.f32 %v1691, %v1699
        %v1702 = vsub.f32 1.0, %v1700
        %v1703 = vsub.f32 1.0, %v1701
        %vm1704 = vcmp.lt.f32.partialorder %v1658, 0.0
        %vm1705 = vcmp.lt.f32.partialorder %v1659, 0.0
        %v1706 = vsub.f32 0.0, %v1702
        %v1707 = vsub.f32 0.0, %v1703
        %v1708 = vsel %vm1704, %v1706, %v1702
        %v1709 = vsel %vm1705, %v1707, %v1703
        %v1710 = vadd.f32 %v1708, 1.0
        %v1711 = vadd.f32 %v1709, 1.0
        %v1712 = vmul.f32 %v1656, %v1710
        %v1713 = vmul.f32 %v1657, %v1711
        %v1714 = vld [vmem:[%s7] sm:$0xff]
        %v1715 = vld [vmem:[%s7 + $0x8] sm:$0xff]
        %v1716 = vld [vmem:[%s7 + $0x10] sm:$0xff]
        %v1717 = vld [vmem:[%s7 + $0x18] sm:$0xff]
        %v1718 = vld [vmem:[%s7 + $0x20] sm:$0xff]
        %v1719 = vld [vmem:[%s7 + $0x28] sm:$0xff]
        %v1720 = vld [vmem:[%s7 + $0x30] sm:$0xff]
        %v1721 = vld [vmem:[%s7 + $0x38] sm:$0xff]
        %v1722 = vld [vmem:[%s7 + $0x40] sm:$0xff]
        %v1723 = vld [vmem:[%s7 + $0x48] sm:$0xff]
        %v1724 = vld [vmem:[%s7 + $0x50] sm:$0xff]
        %v1725 = vld [vmem:[%s7 + $0x58] sm:$0xff]
        %v1726 = vld [vmem:[%s7 + $0x60] sm:$0xff]
        %v1727 = vld [vmem:[%s7 + $0x68] sm:$0xff]
        %v1728 = vld [vmem:[%s7 + $0x70] sm:$0xff]
        %v1729 = vld [vmem:[%s7 + $0x78] sm:$0xff]
        %1730 = vmatprep.subr.mxu0 0.0
        %1731 = vmatpush1.msra.mxu0 %v1714
        %1732 = vmatprep.subr.mxu0 0.0
        %1733 = vmatpush1.msra.mxu0 %v1715
        %1734 = vmatprep.subr.mxu0 0.0
        %1735 = vmatpush1.msra.mxu0 %v1716
        %1736 = vmatprep.subr.mxu0 0.0
        %1737 = vmatpush1.msra.mxu0 %v1717
        %1738 = vmatprep.subr.mxu0 0.0
        %1739 = vmatpush1.msra.mxu0 %v1718
        %1740 = vmatprep.subr.mxu0 0.0
        %1741 = vmatpush1.msra.mxu0 %v1719
        %1742 = vmatprep.subr.mxu0 0.0
        %1743 = vmatpush1.msra.mxu0 %v1720
        %1744 = vmatprep.subr.mxu0 0.0
        %1745 = vmatpush1.msra.mxu0 %v1721
        %1746 = vmatprep.subr.mxu0 0.0
        %1747 = vmatpush1.msra.mxu0 %v1722
        %1748 = vmatprep.subr.mxu0 0.0
        %1749 = vmatpush1.msra.mxu0 %v1723
        %1750 = vmatprep.subr.mxu0 0.0
        %1751 = vmatpush1.msra.mxu0 %v1724
        %1752 = vmatprep.subr.mxu0 0.0
        %1753 = vmatpush1.msra.mxu0 %v1725
        %1754 = vmatprep.subr.mxu0 0.0
        %1755 = vmatpush1.msra.mxu0 %v1726
        %1756 = vmatprep.subr.mxu0 0.0
        %1757 = vmatpush1.msra.mxu0 %v1727
        %1758 = vmatprep.subr.mxu0 0.0
        %1759 = vmatpush1.msra.mxu0 %v1728
        %1760 = vmatprep.subr.mxu0 0.0
        %1761 = vmatpush1.msra.mxu0 %v1729
        %1762 = vmatprep.subr.mxu0 0.0
        %1763 = vmatpush1.msra.mxu0 0.0
        %1764 = vmatprep.subr.mxu0 0.0
        %1765 = vmatpush1.msra.mxu0 0.0
        %1766 = vmatprep.subr.mxu0 0.0
        %1767 = vmatpush1.msra.mxu0 0.0
        %1768 = vmatprep.subr.mxu0 0.0
        %1769 = vmatpush1.msra.mxu0 0.0
        %1770 = vmatprep.subr.mxu0 0.0
        %1771 = vmatpush1.msra.mxu0 0.0
        %1772 = vmatprep.subr.mxu0 0.0
        %1773 = vmatpush1.msra.mxu0 0.0
        %1774 = vmatprep.subr.mxu0 0.0
        %1775 = vmatpush1.msra.mxu0 0.0
        %1776 = vmatprep.subr.mxu0 0.0
        %1777 = vmatpush1.msra.mxu0 0.0
        %1778 = vmatprep.subr.mxu0 0.0
        %1779 = vmatpush1.msra.mxu0 0.0
        %1780 = vmatprep.subr.mxu0 0.0
        %1781 = vmatpush1.msra.mxu0 0.0
        %1782 = vmatprep.subr.mxu0 0.0
        %1783 = vmatpush1.msra.mxu0 0.0
        %1784 = vmatprep.subr.mxu0 0.0
        %1785 = vmatpush1.msra.mxu0 0.0
        %1786 = vmatprep.subr.mxu0 0.0
        %1787 = vmatpush1.msra.mxu0 0.0
        %1788 = vmatprep.subr.mxu0 0.0
        %1789 = vmatpush1.msra.mxu0 0.0
        %1790 = vmatprep.subr.mxu0 0.0
        %1791 = vmatpush1.msra.mxu0 0.0
        %1792 = vmatprep.subr.mxu0 0.0
        %1793 = vmatpush1.msra.mxu0 0.0
        %1794 = vmatprep.mubr.f32.mxu0 0.0
        %1795 = vmatmul.mubr.f32.gmra.mrb[0].mxu0 %v1712
        %v1796 = vpop.f32.mrb[0].mxu0
        %v1797 = vadd.f32 0.0, %v1796
        %v1798 = vpop.f32.mrb[0].mxu0
        %1799 = vmatprep.mubr.f32.mxu0 0.0
        %1800 = vmatmul.mubr.f32.gmra.mrb[0].mxu0 %v1713
        %v1801 = vpop.f32.mrb[0].mxu0
        %v1802 = vadd.f32 0.0, %v1801
        %v1803 = vpop.f32.mrb[0].mxu0
        %1804 = vdwg.mxu0
        %v1805 = vld [vmem:[%s8] sm:$0xff]
        %v1806 = vld [vmem:[%s8 + $0x8] sm:$0xff]
        %v1807 = vmul.f32 %v1797, %v1805
        %v1808 = vmul.f32 %v1802, %v1806
        %v1809 = vsel %vm408, %v1807, 0.0
        %v1810 = vsel %vm408, %v1808, 0.0
        %v1811 = vadd.f32 %v1809, %v1810
        %v1812 = vrot.slane %v1811, 4
        %v1813 = vadd.f32 %v1811, %v1812
        %v1814 = vrot.slane %v1813, 2
        %v1815 = vadd.f32 %v1813, %v1814
        %v1816 = vrot.slane %v1815, 1
        %v1817 = vadd.f32 %v1815, %v1816
        %v1818 = vld [vmem:[%s9] sm:$0xff]
        %v1819 = vld [vmem:[%s9 + $0x8] sm:$0xff]
        %v1820 = vld [vmem:[%s9 + $0x10] sm:$0xff]
        %v1821 = vld [vmem:[%s9 + $0x18] sm:$0xff]
        %v1822 = vld [vmem:[%s9 + $0x20] sm:$0xff]
        %v1823 = vld [vmem:[%s9 + $0x28] sm:$0xff]
        %v1824 = vld [vmem:[%s9 + $0x30] sm:$0xff]
        %v1825 = vld [vmem:[%s9 + $0x38] sm:$0xff]
        %v1826 = vld [vmem:[%s10] sm:$0x1]
        %v1828 = vsel %vm408, %v1817, 0
        %1830 = vmatprep.subr.mxu0 0.0
        %1831 = vmatpush1.msra.mxu0 %v1818
        %1832 = vmatprep.subr.mxu0 0.0
        %1833 = vmatpush1.msra.mxu0 %v1819
        %1834 = vmatprep.subr.mxu0 0.0
        %1835 = vmatpush1.msra.mxu0 %v1820
        %1836 = vmatprep.subr.mxu0 0.0
        %1837 = vmatpush1.msra.mxu0 %v1821
        %1838 = vmatprep.subr.mxu0 0.0
        %1839 = vmatpush1.msra.mxu0 %v1822
        %1840 = vmatprep.subr.mxu0 0.0
        %1841 = vmatpush1.msra.mxu0 %v1823
        %1842 = vmatprep.subr.mxu0 0.0
        %1843 = vmatpush1.msra.mxu0 %v1824
        %1844 = vmatprep.subr.mxu0 0.0
        %1845 = vmatpush1.msra.mxu0 %v1825
        %1846 = vmatprep.subr.mxu0 0.0
        %1847 = vmatpush1.msra.mxu0 0.0
        %1848 = vmatprep.subr.mxu0 0.0
        %1849 = vmatpush1.msra.mxu0 0.0
        %1850 = vmatprep.subr.mxu0 0.0
        %1851 = vmatpush1.msra.mxu0 0.0
        %1852 = vmatprep.subr.mxu0 0.0
        %1853 = vmatpush1.msra.mxu0 0.0
        %1854 = vmatprep.subr.mxu0 0.0
        %1855 = vmatpush1.msra.mxu0 0.0
        %1856 = vmatprep.subr.mxu0 0.0
        %1857 = vmatpush1.msra.mxu0 0.0
        %1858 = vmatprep.subr.mxu0 0.0
        %1859 = vmatpush1.msra.mxu0 0.0
        %1860 = vmatprep.subr.mxu0 0.0
        %1861 = vmatpush1.msra.mxu0 0.0
        %1862 = vmatprep.subr.mxu0 0.0
        %1863 = vmatpush1.msra.mxu0 0.0
        %1864 = vmatprep.subr.mxu0 0.0
        %1865 = vmatpush1.msra.mxu0 0.0
        %1866 = vmatprep.subr.mxu0 0.0
        %1867 = vmatpush1.msra.mxu0 0.0
        %1868 = vmatprep.subr.mxu0 0.0
        %1869 = vmatpush1.msra.mxu0 0.0
        %1870 = vmatprep.subr.mxu0 0.0
        %1871 = vmatpush1.msra.mxu0 0.0
        %1872 = vmatprep.subr.mxu0 0.0
        %1873 = vmatpush1.msra.mxu0 0.0
        %1874 = vmatprep.subr.mxu0 0.0
        %1875 = vmatpush1.msra.mxu0 0.0
        %1876 = vmatprep.subr.mxu0 0.0
        %1877 = vmatpush1.msra.mxu0 0.0
        %1878 = vmatprep.subr.mxu0 0.0
        %1879 = vmatpush1.msra.mxu0 0.0
        %1880 = vmatprep.subr.mxu0 0.0
        %1881 = vmatpush1.msra.mxu0 0.0
        %1882 = vmatprep.subr.mxu0 0.0
        %1883 = vmatpush1.msra.mxu0 0.0
        %1884 = vmatprep.subr.mxu0 0.0
        %1885 = vmatpush1.msra.mxu0 0.0
        %1886 = vmatprep.subr.mxu0 0.0
        %1887 = vmatpush1.msra.mxu0 0.0
        %1888 = vmatprep.subr.mxu0 0.0
        %1889 = vmatpush1.msra.mxu0 0.0
        %1890 = vmatprep.subr.mxu0 0.0
        %1891 = vmatpush1.msra.mxu0 0.0
        %1892 = vmatprep.subr.mxu0 0.0
        %1893 = vmatpush1.msra.mxu0 0.0
        %1894 = vmatprep.mubr.f32.mxu0 0.0
        %1895 = vmatmul.mubr.f32.gmra.mrb[0].mxu0 %v1828
        %v1896 = vpop.f32.mrb[0].mxu0
        %v1897 = vadd.f32 %v1826, %v1896
        %v1898 = vpop.f32.mrb[0].mxu0
        %1899 = vdwg.mxu0
        %vm1900 = vcmask 24576
        %v1901 = vsel %vm1900, %v1897, -inf
        %1902 = vmax.xlane.f32.xlu0 %v1901
        %v1903 = vpop.xlane.xlu0 %1902
        %v1904 = vsub.f32 %v1897, %v1903
        %v1905 = vmul.f32 %v1904, 1.442695
        %v1906 = vpow.pop %v1905
        %v1907 = vsel %vm1900, %v1906, 0.0
        %1908 = vadd.xlane.f32.xlu0 %v1907
        %v1909 = vpop.xlane.xlu0 %1908
        %v1910 = vrcp.pop %v1909
        %v1911 = vmul.f32 %v1906, %v1910
        %1912 = vst.msk [vmem:[%s378] sm:$0x1] %vm1900, %v1911
        %s1913 = sand.u32 %s269, 1
        %s1914 = scalar_lea.sflag [#allocation3], %s1913
        %s1915 = sand.u32 %s269, 1
        %s1916 = scalar_lea.vmem [#allocation2], %s1915
        // Predicated region
        $region65: #{tpu_custom_call.1} parent=63 // pred_check
          %p1917 = pneg %p279
        $region66: #{tpu_custom_call.1} parent=63 // pred_check_branch
          %1919 = sbr.rel (%p1917) target = $region68
        $region67: #{tpu_custom_call.1} parent=63 // pred_region
          %s1921 = ssub.s32 16, 16
          %1922 = vsyncadd %s1914, %s1921
          %s1923 = smul.addr %s25, 16
          %s1924 = scalar_lea.hbm %s11, %s1923
          %s1926 = sshll.u32 %s1916, 4
          %s1927 = int_to_ptr.vmem [resolvable:$true] %s1926
          %1929 = dma.vmem_to_hbm [thread:$0]  %s1927, 16, %s1924, %s1914
        $region68: #{tpu_custom_call.1} parent=63 // pred_fallthru
          _
      $region64: #{tpu_custom_call.1} parent=5 // pred_fallthru
        _
      %p1930 = scmp.le.s32.totalorder 2, %s20
      // Predicated region
      $region69: #{tpu_custom_call.1} parent=5 // pred_check
        %p1931 = pneg %p1930
      $region70: #{tpu_custom_call.1} parent=5 // pred_check_branch
        %1933 = sbr.rel (%p1931) target = $region72
      $region71: #{tpu_custom_call.1} parent=5 // pred_region
        %s1934 = ssub.s32 %s20, 2
        // Predicated region
        $region73: #{tpu_custom_call.1} parent=71 // pred_check
          %p1935 = pneg %p285
        $region74: #{tpu_custom_call.1} parent=71 // pred_check_branch
          %1937 = sbr.rel (%p1935) target = $region76
        $region75: #{tpu_custom_call.1} parent=71 // pred_region
          %s1938 = sand.u32 %s270, 1
          %s1939 = scalar_lea.sflag [#allocation3], %s1938
          %s1940 = sand.u32 %s270, 1
          %s1941 = scalar_lea.vmem [#allocation2], %s1940
          %1942 = dma.done %s1939, 16
        $region76: #{tpu_custom_call.1} parent=71 // pred_fallthru
          _
      $region72: #{tpu_custom_call.1} parent=5 // pred_fallthru
        _
    $region6: #{tpu_custom_call.1} parent=1 // loop_footer
      %s24 = sadd.s32 1, %s20
    $region7: #{tpu_custom_call.1} parent=1 // loop_footer_branch
      %19 = sbr.rel target = $region3
    $region8: #{tpu_custom_call.1} parent=1 // loop_exit
      _
    %1943 = vsyncpa [#allocation3], 1
    %s1944 = scalar_lea.sflag [#allocation3], 1
    %1945 = vsyncpa %s1944, 1

</llo_original>
